<compile_context>
chip_gen: v7x
topology: tpu7x:2x2x1
jax: 0.10.0
libtpu: 0.0.40
codegen_flags: <defaults>
</compile_context>

<pallas_src>
import functools
import math

import jax
import jax.numpy as jnp
from jax import lax
from jax.experimental import pallas as pl
from jax.experimental.pallas import tpu as pltpu


# ----------------------------------------------------------------------------
# Helpers
# ----------------------------------------------------------------------------
def _round_up(x, m):
    return (x + m - 1) // m * m


def _cdiv(a, b):
    return -(-a // b)


def _pick_row_tile(m, max_tile=1024, min_steps=2, unit=16):
    """Pick the row tile and padded row count for the GEMM grid.

    * rows padded UP to a multiple of the tile (no divisor search -> no TM=8 cases)
    * tile capped at `max_tile` (HBM-bound GEMMs hit ~85% of roofline by ~512-1024 rows)
    * tile also capped so the grid has >= `min_steps` steps when possible, so the
      "parallel" grid axis can shard across v7x's 2 TensorCores
    * unit=16 keeps bf16 sublane packing friendly.
    """
    m_u = _round_up(max(m, unit), unit)
    tm = min(max_tile, _round_up(_cdiv(m_u, min_steps), unit))
    m_pad = _round_up(m_u, tm)
    return tm, m_pad


def _vmem_limit_bytes(tm, kpad, cpad, out_itemsize):
    # x tile (double-buffered bf16) + weight (bf16) + output tile + channel vectors.
    est = (2 * tm * kpad * 2) + (2 * kpad * max(cpad, 128) * 2) \
        + (2 * tm * max(cpad, 1) * out_itemsize) + (4 * max(cpad, 128) * 4)
    return int(min(max(2 * est, 16 * 2 ** 20), 64 * 2 ** 20))


def _im2col_nhwc(x, K, S, P):
    """Layout-only KxK patch extraction -> (N*OH*OW, K*K*C). Zero FLOPs."""
    N, H, W, C = x.shape
    OH = (H + 2 * P - K) // S + 1
    OW = (W + 2 * P - K) // S + 1
    xp = jnp.pad(x, ((0, 0), (P, P), (P, P), (0, 0)))
    taps = [xp[:, kh:kh + S * OH:S, kw:kw + S * OW:S, :]
            for kh in range(K) for kw in range(K)]
    patches = jnp.concatenate(taps, axis=-1)              # (N, OH, OW, K*K*C)
    return patches.reshape(N * OH * OW, K * K * C), (N, OH, OW)


# ----------------------------------------------------------------------------
# Fused block kernels
# ----------------------------------------------------------------------------
def _conv_block_kernel(x_ref, w_ref, scale_ref, shift_ref, o_ref, *, activation, neg_slope):
    # x_ref : (TM, Kpad)  bf16 im2col tile   w_ref : (Kpad, Cpad) bf16
    # scale/shift : (1, Cpad) f32 (conv bias + BatchNorm folded)   o_ref : (TM, Cpad) bf16
    z = jnp.dot(x_ref[...], w_ref[...], preferred_element_type=jnp.float32)
    z = z * scale_ref[...] + shift_ref[...]
    if activation == "leakyrelu":
        z = jnp.where(z >= 0.0, z, neg_slope * z)
    elif activation == "sigmoid":
        z = jax.nn.sigmoid(z)
    o_ref[...] = z.astype(o_ref.dtype)


def _conv_head_kernel(x_ref, w_ref, scale_ref, shift_ref, o_ref, *, activation, neg_slope):
    # C_out == 1 head: VPU multiply + lane reduction (no 99%-padding MXU GEMM) and a
    # (TM, 1) store instead of 128 padded output lanes per row.
    x = x_ref[...].astype(jnp.float32)                     # (TM, Kpad)
    w = w_ref[...].astype(jnp.float32)                     # (1, Kpad)
    z = jnp.sum(x * w, axis=-1, keepdims=True)             # (TM, 1)
    z = z * scale_ref[...] + shift_ref[...]
    if activation == "leakyrelu":
        z = jnp.where(z >= 0.0, z, neg_slope * z)
    elif activation == "sigmoid":
        z = jax.nn.sigmoid(z)
    o_ref[...] = z.astype(o_ref.dtype)


# ----------------------------------------------------------------------------
# One Discriminator block: Conv2d(K,S,P) [+ BatchNorm2d] + activation
# ----------------------------------------------------------------------------
def conv_block_forward(x_nhwc, params, *, K, S, P, norm, activation,
                       eps=1e-5, neg_slope=0.2):
    w_oihw = params["w"]
    C_out, C_in = int(w_oihw.shape[0]), int(w_oihw.shape[1])

    patches, (N, OH, OW) = _im2col_nhwc(x_nhwc.astype(jnp.bfloat16), K, S, P)
    M, Kdim = patches.shape

    Kpad = _round_up(Kdim, 128)                            # lane-dense contraction dim
    TM, Mpad = _pick_row_tile(M)
    x2d = jnp.pad(patches, ((0, Mpad - M), (0, Kpad - Kdim)))

    # Host-side fold: conv bias + BatchNorm(inference) -> one per-channel FMA.
    b = params["b"].astype(jnp.float32)
    if norm:
        scale = params["gamma"].astype(jnp.float32) * lax.rsqrt(
            params["var"].astype(jnp.float32) + eps)
        shift = params["beta"].astype(jnp.float32) + (b - params["mean"].astype(jnp.float32)) * scale
    else:
        scale = jnp.ones_like(b)
        shift = b

    w2d = jnp.transpose(w_oihw, (2, 3, 1, 0)).reshape(Kdim, C_out).astype(jnp.bfloat16)
    grid = (Mpad // TM,)

    if C_out == 1:
        # Final 'patch' head: Conv(3,1,1) -> Sigmoid, single output channel.
        w_row = jnp.pad(w2d.reshape(1, Kdim), ((0, 0), (0, Kpad - Kdim)))
        out2d = pl.pallas_call(
            functools.partial(_conv_head_kernel, activation=activation, neg_slope=neg_slope),
            out_shape=jax.ShapeDtypeStruct((Mpad, 1), jnp.float32),
            grid=grid,
            in_specs=[
                pl.BlockSpec((TM, Kpad), lambda i: (i, 0)),
                pl.BlockSpec((1, Kpad), lambda i: (0, 0)),
                pl.BlockSpec((1, 1), lambda i: (0, 0)),
                pl.BlockSpec((1, 1), lambda i: (0, 0)),
            ],
            out_specs=pl.BlockSpec((TM, 1), lambda i: (i, 0)),
            compiler_params=pltpu.CompilerParams(
                dimension_semantics=("parallel",),
                vmem_limit_bytes=_vmem_limit_bytes(TM, Kpad, 1, 4)),
        )(x2d, w_row, scale.reshape(1, 1), shift.reshape(1, 1))
        return out2d[:M, :].reshape(N, OH, OW, 1)

    Cpad = _round_up(C_out, 128)                           # lane-dense output channels
    w2d = jnp.pad(w2d, ((0, Kpad - Kdim), (0, Cpad - C_out)))
    scale = jnp.pad(scale, (0, Cpad - C_out)).reshape(1, Cpad)
    shift = jnp.pad(shift, (0, Cpad - C_out)).reshape(1, Cpad)

    out2d = pl.pallas_call(
        functools.partial(_conv_block_kernel, activation=activation, neg_slope=neg_slope),
        out_shape=jax.ShapeDtypeStruct((Mpad, Cpad), jnp.bfloat16),
        grid=grid,
        in_specs=[
            pl.BlockSpec((TM, Kpad), lambda i: (i, 0)),
            pl.BlockSpec((Kpad, Cpad), lambda i: (0, 0)),   # grid-invariant (no re-DMA)
            pl.BlockSpec((1, Cpad), lambda i: (0, 0)),
            pl.BlockSpec((1, Cpad), lambda i: (0, 0)),
        ],
        out_specs=pl.BlockSpec((TM, Cpad), lambda i: (i, 0)),
        compiler_params=pltpu.CompilerParams(
            dimension_semantics=("parallel",),
            vmem_limit_bytes=_vmem_limit_bytes(TM, Kpad, Cpad, 2)),
    )(x2d, w2d, scale, shift)

    return out2d[:M, :C_out].reshape(N, OH, OW, C_out)


# ----------------------------------------------------------------------------
# 'patch' Discriminator: parameters + forward through the Pallas blocks
# ----------------------------------------------------------------------------
class PallasPatchDiscriminator:
    CHANNELS = [16, 32, 64, 128, 1]

    def __init__(self, key, in_channels=3):
        self.layer_cfgs = []
        self.params = []
        initc = in_channels
        channels = self.CHANNELS
        for i, c_out in enumerate(channels):
            if i == len(channels) - 1:
                cfg = dict(K=3, S=1, P=1, norm=False, activation="sigmoid")
            elif i == 0:
                cfg = dict(K=4, S=2, P=1, norm=False, activation="leakyrelu")
            else:
                cfg = dict(K=4, S=2, P=1, norm=True, activation="leakyrelu")
            key, wk, bk = jax.random.split(key, 3)
            K = cfg["K"]
            # Matches module init: weight ~ N(0, sqrt(2 / (k*k*out_channels)))
            std = math.sqrt(2.0 / (K * K * c_out))
            w = std * jax.random.normal(wk, (c_out, initc, K, K), jnp.float32)
            bound = 1.0 / math.sqrt(initc * K * K)          # default Conv2d bias init
            bias = jax.random.uniform(bk, (c_out,), jnp.float32, -bound, bound)
            p = {"w": w, "b": bias}
            if cfg["norm"]:
                # BatchNorm2d init: weight=1, bias=0; running stats mean=0, var=1.
                p.update(gamma=jnp.ones((c_out,), jnp.float32),
                         beta=jnp.zeros((c_out,), jnp.float32),
                         mean=jnp.zeros((c_out,), jnp.float32),
                         var=jnp.ones((c_out,), jnp.float32))
            self.layer_cfgs.append(cfg)
            self.params.append(p)
            initc = c_out

    def forward(self, x_nchw):
        x = jnp.transpose(x_nchw, (0, 2, 3, 1))             # NCHW -> NHWC (layout only)
        for cfg, p in zip(self.layer_cfgs, self.params):
            x = conv_block_forward(x, p, **cfg)
        return jnp.transpose(x, (0, 3, 1, 2))                # back to NCHW like PyTorch


# ----------------------------------------------------------------------------
# Pure-JAX references for correctness checking
# ----------------------------------------------------------------------------
def _reference_forward(disc, x_nchw, eps=1e-5, neg_slope=0.2, match_bf16=True):
    x = jnp.transpose(x_nchw, (0, 2, 3, 1))
    if match_bf16:
        x = x.astype(jnp.bfloat16)
    for cfg, p in zip(disc.layer_cfgs, disc.params):
        w_hwio = jnp.transpose(p["w"], (2, 3, 1, 0))
        if match_bf16:
            w_hwio = w_hwio.astype(jnp.bfloat16)
        z = lax.conv_general_dilated(
            x, w_hwio, (cfg["S"], cfg["S"]),
            [(cfg["P"], cfg["P"]), (cfg["P"], cfg["P"])],
            dimension_numbers=("NHWC", "HWIO", "NHWC"),
            preferred_element_type=jnp.float32,
            precision=lax.Precision.HIGHEST)
        b = p["b"].astype(jnp.float32)
        if cfg["norm"]:
            s = p["gamma"] * lax.rsqrt(p["var"] + eps)
            z = z * s + (p["beta"] + (b - p["mean"]) * s)
        else:
            z = z + b
        if cfg["activation"] == "leakyrelu":
            z = jnp.where(z >= 0.0, z, neg_slope * z)
            x = z.astype(jnp.bfloat16) if match_bf16 else z
        else:
            x = jax.nn.sigmoid(z)
    return jnp.transpose(x.astype(jnp.float32), (0, 3, 1, 2))


if __name__ == "__main__":
    key = jax.random.PRNGKey(0)
    pkey, xkey = jax.random.split(key)

    disc = PallasPatchDiscriminator(pkey, in_channels=3)
    # batch=2, 3-channel 32x32 image: 4 stride-2 convs + 3x3 conv -> (2, 1, 2, 2) map.
    x = jax.random.normal(xkey, (2, 3, 32, 32), dtype=jnp.float32)

    y = jax.jit(disc.forward)(x)
    jax.block_until_ready(y)

    assert y.shape == (2, 1, 2, 2), y.shape
    assert bool(jnp.all(jnp.isfinite(y)))
    assert bool(jnp.all((y >= 0.0) & (y <= 1.0)))            # sigmoid output range

    # Numerics-matched reference (bf16 weights/activations, f32 accumulation/epilogue).
    y_ref_bf16 = _reference_forward(disc, x, match_bf16=True)
    err_bf16 = float(jnp.max(jnp.abs(y - y_ref_bf16)))
    assert err_bf16 < 1e-2, err_bf16

    # Full-f32 reference: bf16 boundary storage only adds small noise.
    y_ref_f32 = _reference_forward(disc, x, match_bf16=False)
    err_f32 = float(jnp.max(jnp.abs(y - y_ref_f32)))
    assert err_f32 < 5e-2, err_f32

    print("KERNEL_OK")
</pallas_src>

<mosaic_0001>
module attributes {stable_mosaic.version = 11 : i64} {
  func.func @_conv_block_kernel(%arg0: i32, %arg1: memref<256x128xbf16, #tpu.memory_space<vmem>>, %arg2: memref<128x128xbf16, #tpu.memory_space<vmem>>, %arg3: memref<1x128xf32, #tpu.memory_space<vmem>>, %arg4: memref<1x128xf32, #tpu.memory_space<vmem>>, %arg5: memref<256x128xbf16, #tpu.memory_space<vmem>>) attributes {dimension_semantics = [#tpu.dimension_semantics<parallel>], iteration_bounds = array<i64: 2>, scalar_prefetch = 0 : i64, scratch_operands = 0 : i64, tpu.core_type = #tpu.core_type<tc>, window_params = [{transform_indices = @transform_0, window_bounds = array<i64: 256, 128>}, {pipeline_mode = #tpu.pipeline_mode<synchronous>, transform_indices = @transform_1, window_bounds = array<i64: 128, 128>}, {pipeline_mode = #tpu.pipeline_mode<synchronous>, transform_indices = @transform_2, window_bounds = array<i64: 1, 128>}, {pipeline_mode = #tpu.pipeline_mode<synchronous>, transform_indices = @transform_3, window_bounds = array<i64: 1, 128>}, {transform_indices = @transform_4, window_bounds = array<i64: 256, 128>}]} {
    %c0 = arith.constant 0 : index
    %c0_0 = arith.constant 0 : index
    %0 = vector.load %arg1[%c0, %c0_0] : memref<256x128xbf16, #tpu.memory_space<vmem>>, vector<256x128xbf16>
    %c0_1 = arith.constant 0 : index
    %c0_2 = arith.constant 0 : index
    %1 = vector.load %arg2[%c0_1, %c0_2] : memref<128x128xbf16, #tpu.memory_space<vmem>>, vector<128x128xbf16>
    %cst = arith.constant dense<0.000000e+00> : vector<256x128xf32>
    %2 = tpu.matmul %0, %1, %cst {dimension_numbers = #tpu.dot_dimension_numbers<[1], [0], [0], [1], [0, 0, 1, 1], [], []>} : vector<256x128xbf16>, vector<128x128xbf16>, vector<256x128xf32> -> vector<256x128xf32>
    %c0_3 = arith.constant 0 : index
    %c0_4 = arith.constant 0 : index
    %3 = vector.load %arg3[%c0_3, %c0_4] : memref<1x128xf32, #tpu.memory_space<vmem>>, vector<1x128xf32>
    %4 = vector.broadcast %3 : vector<1x128xf32> to vector<256x128xf32>
    %5 = arith.mulf %2, %4 : vector<256x128xf32>
    %c0_5 = arith.constant 0 : index
    %c0_6 = arith.constant 0 : index
    %6 = vector.load %arg4[%c0_5, %c0_6] : memref<1x128xf32, #tpu.memory_space<vmem>>, vector<1x128xf32>
    %7 = vector.broadcast %6 : vector<1x128xf32> to vector<256x128xf32>
    %8 = arith.addf %5, %7 : vector<256x128xf32>
    %cst_7 = arith.constant 0.000000e+00 : f32
    %9 = vector.broadcast %cst_7 : f32 to vector<256x128xf32>
    %10 = arith.cmpf oge, %8, %9 : vector<256x128xf32>
    %cst_8 = arith.constant 2.000000e-01 : f32
    %11 = vector.broadcast %cst_8 : f32 to vector<256x128xf32>
    %12 = arith.mulf %11, %8 : vector<256x128xf32>
    %13 = arith.select %10, %8, %12 : vector<256x128xi1>, vector<256x128xf32>
    %14 = arith.truncf %13 : vector<256x128xf32> to vector<256x128xbf16>
    %c0_9 = arith.constant 0 : index
    %c0_10 = arith.constant 0 : index
    %15 = vector.load %arg5[%c0_9, %c0_10] : memref<256x128xbf16, #tpu.memory_space<vmem>>, vector<256x128xbf16>
    tpu.vector_store %arg5[%c0_9, %c0_10], %14 {strides = array<i32>} : memref<256x128xbf16, #tpu.memory_space<vmem>>, vector<256x128xbf16>,
    return
  }
  func.func @transform_0(%arg0: i32) -> (i32, i32) {
    %c0_i32 = arith.constant 0 : i32
    %c0_i32_0 = arith.constant 0 : i32
    return %arg0, %c0_i32 : i32, i32
  }
  func.func @transform_1(%arg0: i32) -> (i32, i32) {
    %c0_i32 = arith.constant 0 : i32
    %c0_i32_0 = arith.constant 0 : i32
    %c0_i32_1 = arith.constant 0 : i32
    return %c0_i32, %c0_i32_0 : i32, i32
  }
  func.func @transform_2(%arg0: i32) -> (i32, i32) {
    %c0_i32 = arith.constant 0 : i32
    %c0_i32_0 = arith.constant 0 : i32
    %c0_i32_1 = arith.constant 0 : i32
    return %c0_i32, %c0_i32_0 : i32, i32
  }
  func.func @transform_3(%arg0: i32) -> (i32, i32) {
    %c0_i32 = arith.constant 0 : i32
    %c0_i32_0 = arith.constant 0 : i32
    %c0_i32_1 = arith.constant 0 : i32
    return %c0_i32, %c0_i32_0 : i32, i32
  }
  func.func @transform_4(%arg0: i32) -> (i32, i32) {
    %c0_i32 = arith.constant 0 : i32
    %c0_i32_0 = arith.constant 0 : i32
    return %arg0, %c0_i32 : i32, i32
  }
}

module attributes {stable_mosaic.version = 11 : i64} {
  func.func @_conv_block_kernel(%arg0: i32, %arg1: memref<64x256xbf16, #tpu.memory_space<vmem>>, %arg2: memref<256x128xbf16, #tpu.memory_space<vmem>>, %arg3: memref<1x128xf32, #tpu.memory_space<vmem>>, %arg4: memref<1x128xf32, #tpu.memory_space<vmem>>, %arg5: memref<64x128xbf16, #tpu.memory_space<vmem>>) attributes {dimension_semantics = [#tpu.dimension_semantics<parallel>], iteration_bounds = array<i64: 2>, scalar_prefetch = 0 : i64, scratch_operands = 0 : i64, tpu.core_type = #tpu.core_type<tc>, window_params = [{transform_indices = @transform_0, window_bounds = array<i64: 64, 256>}, {pipeline_mode = #tpu.pipeline_mode<synchronous>, transform_indices = @transform_1, window_bounds = array<i64: 256, 128>}, {pipeline_mode = #tpu.pipeline_mode<synchronous>, transform_indices = @transform_2, window_bounds = array<i64: 1, 128>}, {pipeline_mode = #tpu.pipeline_mode<synchronous>, transform_indices = @transform_3, window_bounds = array<i64: 1, 128>}, {transform_indices = @transform_4, window_bounds = array<i64: 64, 128>}]} {
    %c0 = arith.constant 0 : index
    %c0_0 = arith.constant 0 : index
    %0 = vector.load %arg1[%c0, %c0_0] : memref<64x256xbf16, #tpu.memory_space<vmem>>, vector<64x256xbf16>
    %c0_1 = arith.constant 0 : index
    %c0_2 = arith.constant 0 : index
    %1 = vector.load %arg2[%c0_1, %c0_2] : memref<256x128xbf16, #tpu.memory_space<vmem>>, vector<256x128xbf16>
    %cst = arith.constant dense<0.000000e+00> : vector<64x128xf32>
    %2 = tpu.matmul %0, %1, %cst {dimension_numbers = #tpu.dot_dimension_numbers<[1], [0], [0], [1], [0, 0, 1, 1], [], []>} : vector<64x256xbf16>, vector<256x128xbf16>, vector<64x128xf32> -> vector<64x128xf32>
    %c0_3 = arith.constant 0 : index
    %c0_4 = arith.constant 0 : index
    %3 = vector.load %arg3[%c0_3, %c0_4] : memref<1x128xf32, #tpu.memory_space<vmem>>, vector<1x128xf32>
    %4 = vector.broadcast %3 : vector<1x128xf32> to vector<64x128xf32>
    %5 = arith.mulf %2, %4 : vector<64x128xf32>
    %c0_5 = arith.constant 0 : index
    %c0_6 = arith.constant 0 : index
    %6 = vector.load %arg4[%c0_5, %c0_6] : memref<1x128xf32, #tpu.memory_space<vmem>>, vector<1x128xf32>
    %7 = vector.broadcast %6 : vector<1x128xf32> to vector<64x128xf32>
    %8 = arith.addf %5, %7 : vector<64x128xf32>
    %cst_7 = arith.constant 0.000000e+00 : f32
    %9 = vector.broadcast %cst_7 : f32 to vector<64x128xf32>
    %10 = arith.cmpf oge, %8, %9 : vector<64x128xf32>
    %cst_8 = arith.constant 2.000000e-01 : f32
    %11 = vector.broadcast %cst_8 : f32 to vector<64x128xf32>
    %12 = arith.mulf %11, %8 : vector<64x128xf32>
    %13 = arith.select %10, %8, %12 : vector<64x128xi1>, vector<64x128xf32>
    %14 = arith.truncf %13 : vector<64x128xf32> to vector<64x128xbf16>
    %c0_9 = arith.constant 0 : index
    %c0_10 = arith.constant 0 : index
    %15 = vector.load %arg5[%c0_9, %c0_10] : memref<64x128xbf16, #tpu.memory_space<vmem>>, vector<64x128xbf16>
    tpu.vector_store %arg5[%c0_9, %c0_10], %14 {strides = array<i32>} : memref<64x128xbf16, #tpu.memory_space<vmem>>, vector<64x128xbf16>,
    return
  }
  func.func @transform_0(%arg0: i32) -> (i32, i32) {
    %c0_i32 = arith.constant 0 : i32
    %c0_i32_0 = arith.constant 0 : i32
    return %arg0, %c0_i32 : i32, i32
  }
  func.func @transform_1(%arg0: i32) -> (i32, i32) {
    %c0_i32 = arith.constant 0 : i32
    %c0_i32_0 = arith.constant 0 : i32
    %c0_i32_1 = arith.constant 0 : i32
    return %c0_i32, %c0_i32_0 : i32, i32
  }
  func.func @transform_2(%arg0: i32) -> (i32, i32) {
    %c0_i32 = arith.constant 0 : i32
    %c0_i32_0 = arith.constant 0 : i32
    %c0_i32_1 = arith.constant 0 : i32
    return %c0_i32, %c0_i32_0 : i32, i32
  }
  func.func @transform_3(%arg0: i32) -> (i32, i32) {
    %c0_i32 = arith.constant 0 : i32
    %c0_i32_0 = arith.constant 0 : i32
    %c0_i32_1 = arith.constant 0 : i32
    return %c0_i32, %c0_i32_0 : i32, i32
  }
  func.func @transform_4(%arg0: i32) -> (i32, i32) {
    %c0_i32 = arith.constant 0 : i32
    %c0_i32_0 = arith.constant 0 : i32
    return %arg0, %c0_i32 : i32, i32
  }
}

module attributes {stable_mosaic.version = 11 : i64} {
  func.func @_conv_block_kernel(%arg0: i32, %arg1: memref<16x512xbf16, #tpu.memory_space<vmem>>, %arg2: memref<512x128xbf16, #tpu.memory_space<vmem>>, %arg3: memref<1x128xf32, #tpu.memory_space<vmem>>, %arg4: memref<1x128xf32, #tpu.memory_space<vmem>>, %arg5: memref<16x128xbf16, #tpu.memory_space<vmem>>) attributes {dimension_semantics = [#tpu.dimension_semantics<parallel>], iteration_bounds = array<i64: 2>, scalar_prefetch = 0 : i64, scratch_operands = 0 : i64, tpu.core_type = #tpu.core_type<tc>, window_params = [{transform_indices = @transform_0, window_bounds = array<i64: 16, 512>}, {pipeline_mode = #tpu.pipeline_mode<synchronous>, transform_indices = @transform_1, window_bounds = array<i64: 512, 128>}, {pipeline_mode = #tpu.pipeline_mode<synchronous>, transform_indices = @transform_2, window_bounds = array<i64: 1, 128>}, {pipeline_mode = #tpu.pipeline_mode<synchronous>, transform_indices = @transform_3, window_bounds = array<i64: 1, 128>}, {transform_indices = @transform_4, window_bounds = array<i64: 16, 128>}]} {
    %c0 = arith.constant 0 : index
    %c0_0 = arith.constant 0 : index
    %0 = vector.load %arg1[%c0, %c0_0] : memref<16x512xbf16, #tpu.memory_space<vmem>>, vector<16x512xbf16>
    %c0_1 = arith.constant 0 : index
    %c0_2 = arith.constant 0 : index
    %1 = vector.load %arg2[%c0_1, %c0_2] : memref<512x128xbf16, #tpu.memory_space<vmem>>, vector<512x128xbf16>
    %cst = arith.constant dense<0.000000e+00> : vector<16x128xf32>
    %2 = tpu.matmul %0, %1, %cst {dimension_numbers = #tpu.dot_dimension_numbers<[1], [0], [0], [1], [0, 0, 1, 1], [], []>} : vector<16x512xbf16>, vector<512x128xbf16>, vector<16x128xf32> -> vector<16x128xf32>
    %c0_3 = arith.constant 0 : index
    %c0_4 = arith.constant 0 : index
    %3 = vector.load %arg3[%c0_3, %c0_4] : memref<1x128xf32, #tpu.memory_space<vmem>>, vector<1x128xf32>
    %4 = vector.broadcast %3 : vector<1x128xf32> to vector<16x128xf32>
    %5 = arith.mulf %2, %4 : vector<16x128xf32>
    %c0_5 = arith.constant 0 : index
    %c0_6 = arith.constant 0 : index
    %6 = vector.load %arg4[%c0_5, %c0_6] : memref<1x128xf32, #tpu.memory_space<vmem>>, vector<1x128xf32>
    %7 = vector.broadcast %6 : vector<1x128xf32> to vector<16x128xf32>
    %8 = arith.addf %5, %7 : vector<16x128xf32>
    %cst_7 = arith.constant 0.000000e+00 : f32
    %9 = vector.broadcast %cst_7 : f32 to vector<16x128xf32>
    %10 = arith.cmpf oge, %8, %9 : vector<16x128xf32>
    %cst_8 = arith.constant 2.000000e-01 : f32
    %11 = vector.broadcast %cst_8 : f32 to vector<16x128xf32>
    %12 = arith.mulf %11, %8 : vector<16x128xf32>
    %13 = arith.select %10, %8, %12 : vector<16x128xi1>, vector<16x128xf32>
    %14 = arith.truncf %13 : vector<16x128xf32> to vector<16x128xbf16>
    %c0_9 = arith.constant 0 : index
    %c0_10 = arith.constant 0 : index
    %15 = vector.load %arg5[%c0_9, %c0_10] : memref<16x128xbf16, #tpu.memory_space<vmem>>, vector<16x128xbf16>
    tpu.vector_store %arg5[%c0_9, %c0_10], %14 {strides = array<i32>} : memref<16x128xbf16, #tpu.memory_space<vmem>>, vector<16x128xbf16>,
    return
  }
  func.func @transform_0(%arg0: i32) -> (i32, i32) {
    %c0_i32 = arith.constant 0 : i32
    %c0_i32_0 = arith.constant 0 : i32
    return %arg0, %c0_i32 : i32, i32
  }
  func.func @transform_1(%arg0: i32) -> (i32, i32) {
    %c0_i32 = arith.constant 0 : i32
    %c0_i32_0 = arith.constant 0 : i32
    %c0_i32_1 = arith.constant 0 : i32
    return %c0_i32, %c0_i32_0 : i32, i32
  }
  func.func @transform_2(%arg0: i32) -> (i32, i32) {
    %c0_i32 = arith.constant 0 : i32
    %c0_i32_0 = arith.constant 0 : i32
    %c0_i32_1 = arith.constant 0 : i32
    return %c0_i32, %c0_i32_0 : i32, i32
  }
  func.func @transform_3(%arg0: i32) -> (i32, i32) {
    %c0_i32 = arith.constant 0 : i32
    %c0_i32_0 = arith.constant 0 : i32
    %c0_i32_1 = arith.constant 0 : i32
    return %c0_i32, %c0_i32_0 : i32, i32
  }
  func.func @transform_4(%arg0: i32) -> (i32, i32) {
    %c0_i32 = arith.constant 0 : i32
    %c0_i32_0 = arith.constant 0 : i32
    return %arg0, %c0_i32 : i32, i32
  }
}

module attributes {stable_mosaic.version = 11 : i64} {
  func.func @_conv_block_kernel(%arg0: i32, %arg1: memref<16x1024xbf16, #tpu.memory_space<vmem>>, %arg2: memref<1024x128xbf16, #tpu.memory_space<vmem>>, %arg3: memref<1x128xf32, #tpu.memory_space<vmem>>, %arg4: memref<1x128xf32, #tpu.memory_space<vmem>>, %arg5: memref<16x128xbf16, #tpu.memory_space<vmem>>) attributes {dimension_semantics = [#tpu.dimension_semantics<parallel>], iteration_bounds = array<i64: 1>, scalar_prefetch = 0 : i64, scratch_operands = 0 : i64, tpu.core_type = #tpu.core_type<tc>, window_params = [{transform_indices = @transform_0, window_bounds = array<i64: 16, 1024>}, {pipeline_mode = #tpu.pipeline_mode<synchronous>, transform_indices = @transform_1, window_bounds = array<i64: 1024, 128>}, {pipeline_mode = #tpu.pipeline_mode<synchronous>, transform_indices = @transform_2, window_bounds = array<i64: 1, 128>}, {pipeline_mode = #tpu.pipeline_mode<synchronous>, transform_indices = @transform_3, window_bounds = array<i64: 1, 128>}, {transform_indices = @transform_4, window_bounds = array<i64: 16, 128>}]} {
    %c0 = arith.constant 0 : index
    %c0_0 = arith.constant 0 : index
    %0 = vector.load %arg1[%c0, %c0_0] : memref<16x1024xbf16, #tpu.memory_space<vmem>>, vector<16x1024xbf16>
    %c0_1 = arith.constant 0 : index
    %c0_2 = arith.constant 0 : index
    %1 = vector.load %arg2[%c0_1, %c0_2] : memref<1024x128xbf16, #tpu.memory_space<vmem>>, vector<1024x128xbf16>
    %cst = arith.constant dense<0.000000e+00> : vector<16x128xf32>
    %2 = tpu.matmul %0, %1, %cst {dimension_numbers = #tpu.dot_dimension_numbers<[1], [0], [0], [1], [0, 0, 1, 1], [], []>} : vector<16x1024xbf16>, vector<1024x128xbf16>, vector<16x128xf32> -> vector<16x128xf32>
    %c0_3 = arith.constant 0 : index
    %c0_4 = arith.constant 0 : index
    %3 = vector.load %arg3[%c0_3, %c0_4] : memref<1x128xf32, #tpu.memory_space<vmem>>, vector<1x128xf32>
    %4 = vector.broadcast %3 : vector<1x128xf32> to vector<16x128xf32>
    %5 = arith.mulf %2, %4 : vector<16x128xf32>
    %c0_5 = arith.constant 0 : index
    %c0_6 = arith.constant 0 : index
    %6 = vector.load %arg4[%c0_5, %c0_6] : memref<1x128xf32, #tpu.memory_space<vmem>>, vector<1x128xf32>
    %7 = vector.broadcast %6 : vector<1x128xf32> to vector<16x128xf32>
    %8 = arith.addf %5, %7 : vector<16x128xf32>
    %cst_7 = arith.constant 0.000000e+00 : f32
    %9 = vector.broadcast %cst_7 : f32 to vector<16x128xf32>
    %10 = arith.cmpf oge, %8, %9 : vector<16x128xf32>
    %cst_8 = arith.constant 2.000000e-01 : f32
    %11 = vector.broadcast %cst_8 : f32 to vector<16x128xf32>
    %12 = arith.mulf %11, %8 : vector<16x128xf32>
    %13 = arith.select %10, %8, %12 : vector<16x128xi1>, vector<16x128xf32>
    %14 = arith.truncf %13 : vector<16x128xf32> to vector<16x128xbf16>
    %c0_9 = arith.constant 0 : index
    %c0_10 = arith.constant 0 : index
    %15 = vector.load %arg5[%c0_9, %c0_10] : memref<16x128xbf16, #tpu.memory_space<vmem>>, vector<16x128xbf16>
    tpu.vector_store %arg5[%c0_9, %c0_10], %14 {strides = array<i32>} : memref<16x128xbf16, #tpu.memory_space<vmem>>, vector<16x128xbf16>,
    return
  }
  func.func @transform_0(%arg0: i32) -> (i32, i32) {
    %c0_i32 = arith.constant 0 : i32
    %c0_i32_0 = arith.constant 0 : i32
    return %arg0, %c0_i32 : i32, i32
  }
  func.func @transform_1(%arg0: i32) -> (i32, i32) {
    %c0_i32 = arith.constant 0 : i32
    %c0_i32_0 = arith.constant 0 : i32
    %c0_i32_1 = arith.constant 0 : i32
    return %c0_i32, %c0_i32_0 : i32, i32
  }
  func.func @transform_2(%arg0: i32) -> (i32, i32) {
    %c0_i32 = arith.constant 0 : i32
    %c0_i32_0 = arith.constant 0 : i32
    %c0_i32_1 = arith.constant 0 : i32
    return %c0_i32, %c0_i32_0 : i32, i32
  }
  func.func @transform_3(%arg0: i32) -> (i32, i32) {
    %c0_i32 = arith.constant 0 : i32
    %c0_i32_0 = arith.constant 0 : i32
    %c0_i32_1 = arith.constant 0 : i32
    return %c0_i32, %c0_i32_0 : i32, i32
  }
  func.func @transform_4(%arg0: i32) -> (i32, i32) {
    %c0_i32 = arith.constant 0 : i32
    %c0_i32_0 = arith.constant 0 : i32
    return %arg0, %c0_i32 : i32, i32
  }
}

module attributes {stable_mosaic.version = 11 : i64} {
  func.func @_conv_head_kernel(%arg0: i32, %arg1: memref<16x1152xbf16, #tpu.memory_space<vmem>>, %arg2: memref<1x1152xbf16, #tpu.memory_space<vmem>>, %arg3: memref<1x1xf32, #tpu.memory_space<vmem>>, %arg4: memref<1x1xf32, #tpu.memory_space<vmem>>, %arg5: memref<16x1xf32, #tpu.memory_space<vmem>>) attributes {dimension_semantics = [#tpu.dimension_semantics<parallel>], iteration_bounds = array<i64: 1>, scalar_prefetch = 0 : i64, scratch_operands = 0 : i64, tpu.core_type = #tpu.core_type<tc>, window_params = [{transform_indices = @transform_0, window_bounds = array<i64: 16, 1152>}, {pipeline_mode = #tpu.pipeline_mode<synchronous>, transform_indices = @transform_1, window_bounds = array<i64: 1, 1152>}, {pipeline_mode = #tpu.pipeline_mode<synchronous>, transform_indices = @transform_2, window_bounds = array<i64: 1, 1>}, {pipeline_mode = #tpu.pipeline_mode<synchronous>, transform_indices = @transform_3, window_bounds = array<i64: 1, 1>}, {transform_indices = @transform_4, window_bounds = array<i64: 16, 1>}]} {
    %c0 = arith.constant 0 : index
    %c0_0 = arith.constant 0 : index
    %0 = vector.load %arg1[%c0, %c0_0] : memref<16x1152xbf16, #tpu.memory_space<vmem>>, vector<16x1152xbf16>
    %1 = arith.extf %0 : vector<16x1152xbf16> to vector<16x1152xf32>
    %c0_1 = arith.constant 0 : index
    %c0_2 = arith.constant 0 : index
    %2 = vector.load %arg2[%c0_1, %c0_2] : memref<1x1152xbf16, #tpu.memory_space<vmem>>, vector<1x1152xbf16>
    %3 = arith.extf %2 : vector<1x1152xbf16> to vector<1x1152xf32>
    %4 = vector.broadcast %3 : vector<1x1152xf32> to vector<16x1152xf32>
    %5 = arith.mulf %1, %4 : vector<16x1152xf32>
    %cst = arith.constant dense<0.000000e+00> : vector<16xf32>
    %6 = vector.multi_reduction <add>, %5, %cst [1] : vector<16x1152xf32> to vector<16xf32>
    %7 = vector.shape_cast %6 : vector<16xf32> to vector<16x1xf32>
    %c0_3 = arith.constant 0 : index
    %c0_4 = arith.constant 0 : index
    %8 = vector.load %arg3[%c0_3, %c0_4] : memref<1x1xf32, #tpu.memory_space<vmem>>, vector<1x1xf32>
    %9 = vector.broadcast %8 : vector<1x1xf32> to vector<16x1xf32>
    %10 = arith.mulf %7, %9 : vector<16x1xf32>
    %c0_5 = arith.constant 0 : index
    %c0_6 = arith.constant 0 : index
    %11 = vector.load %arg4[%c0_5, %c0_6] : memref<1x1xf32, #tpu.memory_space<vmem>>, vector<1x1xf32>
    %12 = vector.broadcast %11 : vector<1x1xf32> to vector<16x1xf32>
    %13 = arith.addf %10, %12 : vector<16x1xf32>
    %14 = arith.negf %13 : vector<16x1xf32>
    %15 = math.exp %14 : vector<16x1xf32>
    %cst_7 = arith.constant 1.000000e+00 : f32
    %16 = vector.broadcast %cst_7 : f32 to vector<16x1xf32>
    %17 = arith.addf %16, %15 : vector<16x1xf32>
    %18 = arith.divf %16, %17 : vector<16x1xf32>
    %c0_8 = arith.constant 0 : index
    %c0_9 = arith.constant 0 : index
    %19 = vector.load %arg5[%c0_8, %c0_9] : memref<16x1xf32, #tpu.memory_space<vmem>>, vector<16x1xf32>
    tpu.vector_store %arg5[%c0_8, %c0_9], %18 {strides = array<i32>} : memref<16x1xf32, #tpu.memory_space<vmem>>, vector<16x1xf32>,
    return
  }
  func.func @transform_0(%arg0: i32) -> (i32, i32) {
    %c0_i32 = arith.constant 0 : i32
    %c0_i32_0 = arith.constant 0 : i32
    return %arg0, %c0_i32 : i32, i32
  }
  func.func @transform_1(%arg0: i32) -> (i32, i32) {
    %c0_i32 = arith.constant 0 : i32
    %c0_i32_0 = arith.constant 0 : i32
    %c0_i32_1 = arith.constant 0 : i32
    return %c0_i32, %c0_i32_0 : i32, i32
  }
  func.func @transform_2(%arg0: i32) -> (i32, i32) {
    %c0_i32 = arith.constant 0 : i32
    %c0_i32_0 = arith.constant 0 : i32
    %c0_i32_1 = arith.constant 0 : i32
    return %c0_i32, %c0_i32_0 : i32, i32
  }
  func.func @transform_3(%arg0: i32) -> (i32, i32) {
    %c0_i32 = arith.constant 0 : i32
    %c0_i32_0 = arith.constant 0 : i32
    %c0_i32_1 = arith.constant 0 : i32
    return %c0_i32, %c0_i32_0 : i32, i32
  }
  func.func @transform_4(%arg0: i32) -> (i32, i32) {
    %c0_i32 = arith.constant 0 : i32
    %c0_i32_0 = arith.constant 0 : i32
    return %arg0, %c0_i32 : i32, i32
  }
}

</mosaic_0001>

<llo_original>
// kernel: forward.5
$region0: #{forward.5}
  #allocation0 [shape = 'u32[]', space=smem, size = 0x4, offset = 0x4, fixed_abs, tag = 'smem constant byte address 0x4 - core index']
  #allocation1 [shape = 'u32[144,128]{1,0:T(1,128)}', space=vmem, size = 0x12000, scoped, tag = 'internal scratch']
  %s0 = inlined_call_operand.vmem [shape: bf16[512,128], index: 0, kind: input, shape index: {}]
  %s1 = inlined_call_operand.vmem [shape: bf16[128,128], index: 1, kind: input, shape index: {}]
  %s2 = inlined_call_operand.vmem [shape: f32[1,128], index: 2, kind: input, shape index: {}]
  %s3 = inlined_call_operand.vmem [shape: f32[1,128], index: 3, kind: input, shape index: {}]
  %s4 = inlined_call_operand.vmem [shape: bf16[512,128], index: 4, kind: output, shape index: {}]
  %s5 = sld [smem:[#allocation0]]
  $region49: #{forward.5} parent=0
    _
  %s7 = ssub.s32 1, %s5
  %s8 = scalar_select 0, %s7, %s5
  loop: start=0, step=1, limit=4
  $region2: #{forward.5} parent=0 // loop_pre_header
    _
  $region3: #{forward.5} parent=0 // loop_header
    %s10 = sphi 0, %s14
    %p11 = scmp.ge.s32.totalorder %s10, 4
    %s20 = sphi 0, %s22
    %s23 = sphi 0, %s20
    %s24 = sphi 0, %s23
    %s40 = sphi 0, %s24
    %s44 = sphi 0, %s44
    %s46 = sphi 0, %s44
    %s47 = sphi 0, %s46
    %s61 = sphi 0, %s47
    %s65 = sphi 0, %s65
    %s67 = sphi 0, %s65
    %s68 = sphi 0, %s67
    %s82 = sphi 0, %s68
    %s86 = sphi 0, %s86
    %s88 = sphi 0, %s86
    %s89 = sphi 0, %s88
    %s103 = sphi 0, %s89
    %s109 = sphi 0, %s111
    %s112 = sphi 0, %s109
    %s113 = sphi 0, %s112
    %s129 = sphi 0, %s113
  $region4: #{forward.5} parent=0 // loop_header_branch
    %13 = sbr.rel (%p11) target = $region8
  $region5: #{forward.5} parent=0 // loop_body
    %s15 = ssub.s32 %s10, 1
    %s16 = ssub.s32 %s10, 2
    %s17 = sadd.s32 %s10, 1
    %s18 = ssub.s32 %s10, %s17
    %p19 = scmp.eq.s32.totalorder %s18, 0
    %s21 = sadd.s32 %s20, 1
    %s22 = scalar_select %p19, %s20, %s21
    %p25 = pneg %p19
    %p26 = scmp.eq.s32.totalorder %s10, 1
    %p27 = por %p25, %p26
    %p28 = scmp.ne.s32.totalorder %s20, %s23
    %p29 = scmp.eq.s32.totalorder %s10, 0
    %p30 = por %p28, %p29
    %p31 = scmp.ne.s32.totalorder %s20, %s23
    %p32 = scmp.eq.s32.totalorder %s15, 1
    %p33 = por %p31, %p32
    %p34 = scmp.ne.s32.totalorder %s23, %s24
    %p35 = scmp.eq.s32.totalorder %s15, 0
    %p36 = por %p34, %p35
    %p37 = scmp.ne.s32.totalorder %s23, %s24
    %p38 = scmp.eq.s32.totalorder %s16, 1
    %p39 = por %p37, %p38
    %p41 = scmp.ne.s32.totalorder %s24, %s40
    %p42 = scmp.eq.s32.totalorder %s16, 0
    %p43 = por %p41, %p42
    %s45 = sadd.s32 %s44, 1
    %p48 = scmp.eq.s32.totalorder %s10, 1
    %p49 = scmp.ne.s32.totalorder %s44, %s46
    %p50 = scmp.eq.s32.totalorder %s10, 0
    %p51 = por %p49, %p50
    %p52 = scmp.ne.s32.totalorder %s44, %s46
    %p53 = scmp.eq.s32.totalorder %s15, 1
    %p54 = por %p52, %p53
    %p55 = scmp.ne.s32.totalorder %s46, %s47
    %p56 = scmp.eq.s32.totalorder %s15, 0
    %p57 = por %p55, %p56
    %p58 = scmp.ne.s32.totalorder %s46, %s47
    %p59 = scmp.eq.s32.totalorder %s16, 1
    %p60 = por %p58, %p59
    %p62 = scmp.ne.s32.totalorder %s47, %s61
    %p63 = scmp.eq.s32.totalorder %s16, 0
    %p64 = por %p62, %p63
    %s66 = sadd.s32 %s65, 1
    %p69 = scmp.eq.s32.totalorder %s10, 1
    %p70 = scmp.ne.s32.totalorder %s65, %s67
    %p71 = scmp.eq.s32.totalorder %s10, 0
    %p72 = por %p70, %p71
    %p73 = scmp.ne.s32.totalorder %s65, %s67
    %p74 = scmp.eq.s32.totalorder %s15, 1
    %p75 = por %p73, %p74
    %p76 = scmp.ne.s32.totalorder %s67, %s68
    %p77 = scmp.eq.s32.totalorder %s15, 0
    %p78 = por %p76, %p77
    %p79 = scmp.ne.s32.totalorder %s67, %s68
    %p80 = scmp.eq.s32.totalorder %s16, 1
    %p81 = por %p79, %p80
    %p83 = scmp.ne.s32.totalorder %s68, %s82
    %p84 = scmp.eq.s32.totalorder %s16, 0
    %p85 = por %p83, %p84
    %s87 = sadd.s32 %s86, 1
    %p90 = scmp.eq.s32.totalorder %s10, 1
    %p91 = scmp.ne.s32.totalorder %s86, %s88
    %p92 = scmp.eq.s32.totalorder %s10, 0
    %p93 = por %p91, %p92
    %p94 = scmp.ne.s32.totalorder %s86, %s88
    %p95 = scmp.eq.s32.totalorder %s15, 1
    %p96 = por %p94, %p95
    %p97 = scmp.ne.s32.totalorder %s88, %s89
    %p98 = scmp.eq.s32.totalorder %s15, 0
    %p99 = por %p97, %p98
    %p100 = scmp.ne.s32.totalorder %s88, %s89
    %p101 = scmp.eq.s32.totalorder %s16, 1
    %p102 = por %p100, %p101
    %p104 = scmp.ne.s32.totalorder %s89, %s103
    %p105 = scmp.eq.s32.totalorder %s16, 0
    %p106 = por %p104, %p105
    %s107 = ssub.s32 %s10, %s17
    %p108 = scmp.eq.s32.totalorder %s107, 0
    %s110 = sadd.s32 %s109, 1
    %s111 = scalar_select %p108, %s109, %s110
    %p114 = pneg %p108
    %p115 = scmp.eq.s32.totalorder %s10, 1
    %p116 = por %p114, %p115
    %p117 = scmp.ne.s32.totalorder %s109, %s112
    %p118 = scmp.eq.s32.totalorder %s10, 0
    %p119 = por %p117, %p118
    %p120 = scmp.ne.s32.totalorder %s109, %s112
    %p121 = scmp.eq.s32.totalorder %s15, 1
    %p122 = por %p120, %p121
    %p123 = scmp.ne.s32.totalorder %s112, %s113
    %p124 = scmp.eq.s32.totalorder %s15, 0
    %p125 = por %p123, %p124
    %p126 = scmp.ne.s32.totalorder %s112, %s113
    %p127 = scmp.eq.s32.totalorder %s16, 1
    %p128 = por %p126, %p127
    %p130 = scmp.ne.s32.totalorder %s113, %s129
    %p131 = scmp.eq.s32.totalorder %s16, 0
    %p132 = por %p130, %p131
    %p133 = scmp.le.s32.totalorder 1, %s10
    %p134 = scmp.lt.s32.totalorder %s10, 3
    %p135 = pnand %p133, %p134
    %p136 = pneg %p135
    // Predicated region
    $region9: #{forward.5} parent=5 // pred_check
      _
    $region10: #{forward.5} parent=5 // pred_check_branch
      %138 = sbr.rel (%p135) target = $region12
    $region11: #{forward.5} parent=5 // pred_region
      %s139 = ssub.s32 %s10, 1
      // Predicated region
      $region13: #{forward.5} parent=11 // pred_check
        %p140 = pneg %p57
      $region14: #{forward.5} parent=11 // pred_check_branch
        %142 = sbr.rel (%p140) target = $region16
      $region15: #{forward.5} parent=11 // pred_region
        _
      $region16: #{forward.5} parent=11 // pred_fallthru
        _
      // Predicated region
      $region17: #{forward.5} parent=11 // pred_check
        %p143 = pneg %p78
      $region18: #{forward.5} parent=11 // pred_check_branch
        %145 = sbr.rel (%p143) target = $region20
      $region19: #{forward.5} parent=11 // pred_region
        _
      $region20: #{forward.5} parent=11 // pred_fallthru
        _
      // Predicated region
      $region21: #{forward.5} parent=11 // pred_check
        %p146 = pneg %p99
      $region22: #{forward.5} parent=11 // pred_check_branch
        %148 = sbr.rel (%p146) target = $region24
      $region23: #{forward.5} parent=11 // pred_region
        _
      $region24: #{forward.5} parent=11 // pred_fallthru
        _
    $region12: #{forward.5} parent=5 // pred_fallthru
      _
    %p149 = scmp.lt.s32.totalorder %s10, 2
    // Predicated region
    $region25: #{forward.5} parent=5 // pred_check
      %p150 = pneg %p149
    $region26: #{forward.5} parent=5 // pred_check_branch
      %152 = sbr.rel (%p150) target = $region28
    $region27: #{forward.5} parent=5 // pred_region
      // Predicated region
      $region29: #{forward.5} parent=27 // pred_check
        %p153 = pneg %p30
      $region30: #{forward.5} parent=27 // pred_check_branch
        %155 = sbr.rel (%p153) target = $region32
      $region31: #{forward.5} parent=27 // pred_region
        %s156 = smul.u32 32, %s10
        %p157 = scmp.lt.s32.totalorder %s156, 63
        %s158 = scalar_select %p157, %s156, 63
        %s159 = smul.addr %s158, 4
        %s160 = scalar_lea.vmem %s0, %s159
        %s161 = smul.u32 32, %s10
      $region32: #{forward.5} parent=27 // pred_fallthru
        _
    $region28: #{forward.5} parent=5 // pred_fallthru
      _
    %p162 = scmp.le.s32.totalorder 1, %s10
    %p163 = scmp.lt.s32.totalorder %s10, 3
    %p164 = pnand %p162, %p163
    %p165 = pneg %p164
    // Predicated region
    $region33: #{forward.5} parent=5 // pred_check
      _
    $region34: #{forward.5} parent=5 // pred_check_branch
      %167 = sbr.rel (%p164) target = $region36
    $region35: #{forward.5} parent=5 // pred_region
      %s168 = ssub.s32 %s10, 1
      %s169 = smul.u32 32, %s15
      %p170 = scmp.lt.s32.totalorder %s169, 63
      %s171 = scalar_select %p170, %s169, 63
      %s172 = smul.addr %s171, 4
      %s173 = scalar_lea.vmem %s0, %s172
      %p174 = pneg %p36
      %p175 = pneg %p33
      %p176 = pneg %p57
      %p177 = pneg %p54
      %p178 = pneg %p78
      %p179 = pneg %p75
      %p180 = pneg %p99
      %p181 = pneg %p96
      %p182 = pneg %p125
      %p183 = pneg %p122
      %s184 = smul.u32 32, %s15
      %p185 = scmp.lt.s32.totalorder %s184, 63
      %s186 = scalar_select %p185, %s184, 63
      %s187 = smul.addr %s186, 4
      %s188 = scalar_lea.vmem %s4, %s187
      %s189 = smul.u32 32, %s15
      %p190 = scmp.lt.s32.totalorder %s189, 63
      %s191 = scalar_select %p190, %s189, 63
      %s192 = smul.addr %s191, 4
      %s193 = scalar_lea.vmem %s0, %s192
      %s194 = smul.u32 32, %s15
      %s195 = smul.u32 32, %s15
      %p196 = scmp.lt.s32.totalorder %s195, 63
      %s197 = scalar_select %p196, %s195, 63
      %s198 = smul.addr %s197, 4
      %s199 = scalar_lea.vmem %s4, %s198
      %s200 = smul.u32 32, %s15
      %v202 = vld [vmem:[%s193] sm:$0xf]
      %v203 = vld [vmem:[%s193 + $0x4] sm:$0xf]
      %v204 = vld [vmem:[%s193 + $0x8] sm:$0xf]
      %v205 = vld [vmem:[%s193 + $0xc] sm:$0xf]
      %v206 = vld [vmem:[%s193 + $0x10] sm:$0xf]
      %v207 = vld [vmem:[%s193 + $0x14] sm:$0xf]
      %v208 = vld [vmem:[%s193 + $0x18] sm:$0xf]
      %v209 = vld [vmem:[%s193 + $0x1c] sm:$0xf]
      %v210 = vld [vmem:[%s193 + $0x20] sm:$0xf]
      %v211 = vld [vmem:[%s193 + $0x24] sm:$0xf]
      %v212 = vld [vmem:[%s193 + $0x28] sm:$0xf]
      %v213 = vld [vmem:[%s193 + $0x2c] sm:$0xf]
      %v214 = vld [vmem:[%s193 + $0x30] sm:$0xf]
      %v215 = vld [vmem:[%s193 + $0x34] sm:$0xf]
      %v216 = vld [vmem:[%s193 + $0x38] sm:$0xf]
      %v217 = vld [vmem:[%s193 + $0x3c] sm:$0xf]
      %v218 = vld [vmem:[%s193 + $0x40] sm:$0xf]
      %v219 = vld [vmem:[%s193 + $0x44] sm:$0xf]
      %v220 = vld [vmem:[%s193 + $0x48] sm:$0xf]
      %v221 = vld [vmem:[%s193 + $0x4c] sm:$0xf]
      %v222 = vld [vmem:[%s193 + $0x50] sm:$0xf]
      %v223 = vld [vmem:[%s193 + $0x54] sm:$0xf]
      %v224 = vld [vmem:[%s193 + $0x58] sm:$0xf]
      %v225 = vld [vmem:[%s193 + $0x5c] sm:$0xf]
      %v226 = vld [vmem:[%s193 + $0x60] sm:$0xf]
      %v227 = vld [vmem:[%s193 + $0x64] sm:$0xf]
      %v228 = vld [vmem:[%s193 + $0x68] sm:$0xf]
      %v229 = vld [vmem:[%s193 + $0x6c] sm:$0xf]
      %v230 = vld [vmem:[%s193 + $0x70] sm:$0xf]
      %v231 = vld [vmem:[%s193 + $0x74] sm:$0xf]
      %v232 = vld [vmem:[%s193 + $0x78] sm:$0xf]
      %v233 = vld [vmem:[%s193 + $0x7c] sm:$0xf]
      %v234 = vld [vmem:[%s1] sm:$0xf]
      %v235 = vld [vmem:[%s1 + $0x4] sm:$0xf]
      %v236 = vld [vmem:[%s1 + $0x8] sm:$0xf]
      %v237 = vld [vmem:[%s1 + $0xc] sm:$0xf]
      %v238 = vld [vmem:[%s1 + $0x10] sm:$0xf]
      %v239 = vld [vmem:[%s1 + $0x14] sm:$0xf]
      %v240 = vld [vmem:[%s1 + $0x18] sm:$0xf]
      %v241 = vld [vmem:[%s1 + $0x1c] sm:$0xf]
      %v242 = vld [vmem:[%s1 + $0x20] sm:$0xf]
      %v243 = vld [vmem:[%s1 + $0x24] sm:$0xf]
      %v244 = vld [vmem:[%s1 + $0x28] sm:$0xf]
      %v245 = vld [vmem:[%s1 + $0x2c] sm:$0xf]
      %v246 = vld [vmem:[%s1 + $0x30] sm:$0xf]
      %v247 = vld [vmem:[%s1 + $0x34] sm:$0xf]
      %v248 = vld [vmem:[%s1 + $0x38] sm:$0xf]
      %v249 = vld [vmem:[%s1 + $0x3c] sm:$0xf]
      %v282 = vunpack.c.l.b16 %v202
      %v283 = vunpack.c.l.b16 %v203
      %v284 = vunpack.c.l.b16 %v204
      %v285 = vunpack.c.l.b16 %v205
      %v286 = vunpack.c.l.b16 %v206
      %v287 = vunpack.c.l.b16 %v207
      %v288 = vunpack.c.l.b16 %v208
      %v289 = vunpack.c.l.b16 %v209
      %v290 = vunpack.c.l.b16 %v210
      %v291 = vunpack.c.l.b16 %v211
      %v292 = vunpack.c.l.b16 %v212
      %v293 = vunpack.c.l.b16 %v213
      %v294 = vunpack.c.l.b16 %v214
      %v295 = vunpack.c.l.b16 %v215
      %v296 = vunpack.c.l.b16 %v216
      %v297 = vunpack.c.l.b16 %v217
      %v298 = vunpack.c.l.b16 %v218
      %v299 = vunpack.c.l.b16 %v219
      %v300 = vunpack.c.l.b16 %v220
      %v301 = vunpack.c.l.b16 %v221
      %v302 = vunpack.c.l.b16 %v222
      %v303 = vunpack.c.l.b16 %v223
      %v304 = vunpack.c.l.b16 %v224
      %v305 = vunpack.c.l.b16 %v225
      %v306 = vunpack.c.l.b16 %v226
      %v307 = vunpack.c.l.b16 %v227
      %v308 = vunpack.c.l.b16 %v228
      %v309 = vunpack.c.l.b16 %v229
      %v310 = vunpack.c.l.b16 %v230
      %v311 = vunpack.c.l.b16 %v231
      %v312 = vunpack.c.l.b16 %v232
      %v313 = vunpack.c.l.b16 %v233
      %v314 = vpack.c.b16 %v283, %v282
      %v315 = vpack.c.b16 %v285, %v284
      %v316 = vpack.c.b16 %v287, %v286
      %v317 = vpack.c.b16 %v289, %v288
      %v318 = vpack.c.b16 %v291, %v290
      %v319 = vpack.c.b16 %v293, %v292
      %v320 = vpack.c.b16 %v295, %v294
      %v321 = vpack.c.b16 %v297, %v296
      %v322 = vpack.c.b16 %v299, %v298
      %v323 = vpack.c.b16 %v301, %v300
      %v324 = vpack.c.b16 %v303, %v302
      %v325 = vpack.c.b16 %v305, %v304
      %v326 = vpack.c.b16 %v307, %v306
      %v327 = vpack.c.b16 %v309, %v308
      %v328 = vpack.c.b16 %v311, %v310
      %v329 = vpack.c.b16 %v313, %v312
      %v362 = vunpack.c.l.b16 %v234
      %v363 = vunpack.c.l.b16 %v235
      %v364 = vunpack.c.l.b16 %v236
      %v365 = vunpack.c.l.b16 %v237
      %v366 = vunpack.c.l.b16 %v238
      %v367 = vunpack.c.l.b16 %v239
      %v368 = vunpack.c.l.b16 %v240
      %v369 = vunpack.c.l.b16 %v241
      %v370 = vunpack.c.l.b16 %v242
      %v371 = vunpack.c.l.b16 %v243
      %v372 = vunpack.c.l.b16 %v244
      %v373 = vunpack.c.l.b16 %v245
      %v374 = vunpack.c.l.b16 %v246
      %v375 = vunpack.c.l.b16 %v247
      %v376 = vunpack.c.l.b16 %v248
      %v377 = vunpack.c.l.b16 %v249
      %v378 = vpack.c.b16 %v363, %v362
      %v379 = vpack.c.b16 %v365, %v364
      %v380 = vpack.c.b16 %v367, %v366
      %v381 = vpack.c.b16 %v369, %v368
      %v382 = vpack.c.b16 %v371, %v370
      %v383 = vpack.c.b16 %v373, %v372
      %v384 = vpack.c.b16 %v375, %v374
      %v385 = vpack.c.b16 %v377, %v376
      %394 = vmatprep.subr.bf16.mxu0 0
      %395 = vmatpush1.bf16.msra.mxu0 %v378
      %396 = vmatprep.subr.bf16.mxu0 0
      %397 = vmatpush1.bf16.msra.mxu0 %v379
      %398 = vmatprep.subr.bf16.mxu0 0
      %399 = vmatpush1.bf16.msra.mxu0 %v380
      %400 = vmatprep.subr.bf16.mxu0 0
      %401 = vmatpush1.bf16.msra.mxu0 %v381
      %402 = vmatprep.subr.bf16.mxu0 0
      %403 = vmatpush1.bf16.msra.mxu0 %v382
      %404 = vmatprep.subr.bf16.mxu0 0
      %405 = vmatpush1.bf16.msra.mxu0 %v383
      %406 = vmatprep.subr.bf16.mxu0 0
      %407 = vmatpush1.bf16.msra.mxu0 %v384
      %408 = vmatprep.subr.bf16.mxu0 0
      %409 = vmatpush1.bf16.msra.mxu0 %v385
      %410 = vmatprep.subr.bf16.mxu0 0
      %411 = vmatpush1.bf16.msra.mxu0 0
      %412 = vmatprep.subr.bf16.mxu0 0
      %413 = vmatpush1.bf16.msra.mxu0 0
      %414 = vmatprep.subr.bf16.mxu0 0
      %415 = vmatpush1.bf16.msra.mxu0 0
      %416 = vmatprep.subr.bf16.mxu0 0
      %417 = vmatpush1.bf16.msra.mxu0 0
      %418 = vmatprep.subr.bf16.mxu0 0
      %419 = vmatpush1.bf16.msra.mxu0 0
      %420 = vmatprep.subr.bf16.mxu0 0
      %421 = vmatpush1.bf16.msra.mxu0 0
      %422 = vmatprep.subr.bf16.mxu0 0
      %423 = vmatpush1.bf16.msra.mxu0 0
      %424 = vmatprep.subr.bf16.mxu0 0
      %425 = vmatpush1.bf16.msra.mxu0 0
      %426 = vmatprep.mubr.bf16.mxu0 0
      %427 = vmatmul.mubr.bf16.gmra.mrb[0].mxu0 %v314
      %v428 = vpop.f32.mrb[0].mxu0
      %v429 = vadd.f32 0.0, %v428
      %v430 = vpop.f32.mrb[0].mxu0
      %v431 = vpop.f32.mrb[0].mxu0
      %v432 = vadd.f32 0.0, %v431
      %v433 = vpop.f32.mrb[0].mxu0
      %434 = vmatprep.mubr.bf16.mxu0 0
      %435 = vmatmul.mubr.bf16.gmra.mrb[0].mxu0 %v315
      %v436 = vpop.f32.mrb[0].mxu0
      %v437 = vadd.f32 0.0, %v436
      %v438 = vpop.f32.mrb[0].mxu0
      %v439 = vpop.f32.mrb[0].mxu0
      %v440 = vadd.f32 0.0, %v439
      %v441 = vpop.f32.mrb[0].mxu0
      %442 = vmatprep.mubr.bf16.mxu0 0
      %443 = vmatmul.mubr.bf16.gmra.mrb[0].mxu0 %v316
      %v444 = vpop.f32.mrb[0].mxu0
      %v445 = vadd.f32 0.0, %v444
      %v446 = vpop.f32.mrb[0].mxu0
      %v447 = vpop.f32.mrb[0].mxu0
      %v448 = vadd.f32 0.0, %v447
      %v449 = vpop.f32.mrb[0].mxu0
      %450 = vmatprep.mubr.bf16.mxu0 0
      %451 = vmatmul.mubr.bf16.gmra.mrb[0].mxu0 %v317
      %v452 = vpop.f32.mrb[0].mxu0
      %v453 = vadd.f32 0.0, %v452
      %v454 = vpop.f32.mrb[0].mxu0
      %v455 = vpop.f32.mrb[0].mxu0
      %v456 = vadd.f32 0.0, %v455
      %v457 = vpop.f32.mrb[0].mxu0
      %458 = vmatprep.mubr.bf16.mxu0 0
      %459 = vmatmul.mubr.bf16.gmra.mrb[0].mxu0 %v318
      %v460 = vpop.f32.mrb[0].mxu0
      %v461 = vadd.f32 0.0, %v460
      %v462 = vpop.f32.mrb[0].mxu0
      %v463 = vpop.f32.mrb[0].mxu0
      %v464 = vadd.f32 0.0, %v463
      %v465 = vpop.f32.mrb[0].mxu0
      %466 = vmatprep.mubr.bf16.mxu0 0
      %467 = vmatmul.mubr.bf16.gmra.mrb[0].mxu0 %v319
      %v468 = vpop.f32.mrb[0].mxu0
      %v469 = vadd.f32 0.0, %v468
      %v470 = vpop.f32.mrb[0].mxu0
      %v471 = vpop.f32.mrb[0].mxu0
      %v472 = vadd.f32 0.0, %v471
      %v473 = vpop.f32.mrb[0].mxu0
      %474 = vmatprep.mubr.bf16.mxu0 0
      %475 = vmatmul.mubr.bf16.gmra.mrb[0].mxu0 %v320
      %v476 = vpop.f32.mrb[0].mxu0
      %v477 = vadd.f32 0.0, %v476
      %v478 = vpop.f32.mrb[0].mxu0
      %v479 = vpop.f32.mrb[0].mxu0
      %v480 = vadd.f32 0.0, %v479
      %v481 = vpop.f32.mrb[0].mxu0
      %482 = vmatprep.mubr.bf16.mxu0 0
      %483 = vmatmul.mubr.bf16.gmra.mrb[0].mxu0 %v321
      %v484 = vpop.f32.mrb[0].mxu0
      %v485 = vadd.f32 0.0, %v484
      %v486 = vpop.f32.mrb[0].mxu0
      %v487 = vpop.f32.mrb[0].mxu0
      %v488 = vadd.f32 0.0, %v487
      %v489 = vpop.f32.mrb[0].mxu0
      %490 = vmatprep.mubr.bf16.mxu0 0
      %491 = vmatmul.mubr.bf16.gmra.mrb[0].mxu0 %v322
      %v492 = vpop.f32.mrb[0].mxu0
      %v493 = vadd.f32 0.0, %v492
      %v494 = vpop.f32.mrb[0].mxu0
      %v495 = vpop.f32.mrb[0].mxu0
      %v496 = vadd.f32 0.0, %v495
      %v497 = vpop.f32.mrb[0].mxu0
      %498 = vmatprep.mubr.bf16.mxu0 0
      %499 = vmatmul.mubr.bf16.gmra.mrb[0].mxu0 %v323
      %v500 = vpop.f32.mrb[0].mxu0
      %v501 = vadd.f32 0.0, %v500
      %v502 = vpop.f32.mrb[0].mxu0
      %v503 = vpop.f32.mrb[0].mxu0
      %v504 = vadd.f32 0.0, %v503
      %v505 = vpop.f32.mrb[0].mxu0
      %506 = vmatprep.mubr.bf16.mxu0 0
      %507 = vmatmul.mubr.bf16.gmra.mrb[0].mxu0 %v324
      %v508 = vpop.f32.mrb[0].mxu0
      %v509 = vadd.f32 0.0, %v508
      %v510 = vpop.f32.mrb[0].mxu0
      %v511 = vpop.f32.mrb[0].mxu0
      %v512 = vadd.f32 0.0, %v511
      %v513 = vpop.f32.mrb[0].mxu0
      %514 = vmatprep.mubr.bf16.mxu0 0
      %515 = vmatmul.mubr.bf16.gmra.mrb[0].mxu0 %v325
      %v516 = vpop.f32.mrb[0].mxu0
      %v517 = vadd.f32 0.0, %v516
      %v518 = vpop.f32.mrb[0].mxu0
      %v519 = vpop.f32.mrb[0].mxu0
      %v520 = vadd.f32 0.0, %v519
      %v521 = vpop.f32.mrb[0].mxu0
      %522 = vmatprep.mubr.bf16.mxu0 0
      %523 = vmatmul.mubr.bf16.gmra.mrb[0].mxu0 %v326
      %v524 = vpop.f32.mrb[0].mxu0
      %v525 = vadd.f32 0.0, %v524
      %v526 = vpop.f32.mrb[0].mxu0
      %v527 = vpop.f32.mrb[0].mxu0
      %v528 = vadd.f32 0.0, %v527
      %v529 = vpop.f32.mrb[0].mxu0
      %530 = vmatprep.mubr.bf16.mxu0 0
      %531 = vmatmul.mubr.bf16.gmra.mrb[0].mxu0 %v327
      %v532 = vpop.f32.mrb[0].mxu0
      %v533 = vadd.f32 0.0, %v532
      %v534 = vpop.f32.mrb[0].mxu0
      %v535 = vpop.f32.mrb[0].mxu0
      %v536 = vadd.f32 0.0, %v535
      %v537 = vpop.f32.mrb[0].mxu0
      %538 = vmatprep.mubr.bf16.mxu0 0
      %539 = vmatmul.mubr.bf16.gmra.mrb[0].mxu0 %v328
      %v540 = vpop.f32.mrb[0].mxu0
      %v541 = vadd.f32 0.0, %v540
      %v542 = vpop.f32.mrb[0].mxu0
      %v543 = vpop.f32.mrb[0].mxu0
      %v544 = vadd.f32 0.0, %v543
      %v545 = vpop.f32.mrb[0].mxu0
      %546 = vmatprep.mubr.bf16.mxu0 0
      %547 = vmatmul.mubr.bf16.gmra.mrb[0].mxu0 %v329
      %v548 = vpop.f32.mrb[0].mxu0
      %v549 = vadd.f32 0.0, %v548
      %v550 = vpop.f32.mrb[0].mxu0
      %v551 = vpop.f32.mrb[0].mxu0
      %v552 = vadd.f32 0.0, %v551
      %v553 = vpop.f32.mrb[0].mxu0
      %554 = vdwg.mxu0
      %v555 = vld [vmem:[%s2] sm:$0x1]
      %v557 = vlaneseq
      %v558 = vshrl.u32 %v557, 7
      %v559 = vsub.s32 0, %v558
      %v560 = vrot.slane %v555, %v559
      %v562 = vmul.f32 %v429, %v560
      %v563 = vmul.f32 %v432, %v560
      %v564 = vmul.f32 %v437, %v560
      %v565 = vmul.f32 %v440, %v560
      %v566 = vmul.f32 %v445, %v560
      %v567 = vmul.f32 %v448, %v560
      %v568 = vmul.f32 %v453, %v560
      %v569 = vmul.f32 %v456, %v560
      %v570 = vmul.f32 %v461, %v560
      %v571 = vmul.f32 %v464, %v560
      %v572 = vmul.f32 %v469, %v560
      %v573 = vmul.f32 %v472, %v560
      %v574 = vmul.f32 %v477, %v560
      %v575 = vmul.f32 %v480, %v560
      %v576 = vmul.f32 %v485, %v560
      %v577 = vmul.f32 %v488, %v560
      %v578 = vmul.f32 %v493, %v560
      %v579 = vmul.f32 %v496, %v560
      %v580 = vmul.f32 %v501, %v560
      %v581 = vmul.f32 %v504, %v560
      %v582 = vmul.f32 %v509, %v560
      %v583 = vmul.f32 %v512, %v560
      %v584 = vmul.f32 %v517, %v560
      %v585 = vmul.f32 %v520, %v560
      %v586 = vmul.f32 %v525, %v560
      %v587 = vmul.f32 %v528, %v560
      %v588 = vmul.f32 %v533, %v560
      %v589 = vmul.f32 %v536, %v560
      %v590 = vmul.f32 %v541, %v560
      %v591 = vmul.f32 %v544, %v560
      %v592 = vmul.f32 %v549, %v560
      %v593 = vmul.f32 %v552, %v560
      %v594 = vld [vmem:[%s3] sm:$0x1]
      %v596 = vlaneseq
      %v597 = vshrl.u32 %v596, 7
      %v598 = vsub.s32 0, %v597
      %v599 = vrot.slane %v594, %v598
      %v601 = vadd.f32 %v562, %v599
      %v602 = vadd.f32 %v563, %v599
      %v603 = vadd.f32 %v564, %v599
      %v604 = vadd.f32 %v565, %v599
      %v605 = vadd.f32 %v566, %v599
      %v606 = vadd.f32 %v567, %v599
      %v607 = vadd.f32 %v568, %v599
      %v608 = vadd.f32 %v569, %v599
      %v609 = vadd.f32 %v570, %v599
      %v610 = vadd.f32 %v571, %v599
      %v611 = vadd.f32 %v572, %v599
      %v612 = vadd.f32 %v573, %v599
      %v613 = vadd.f32 %v574, %v599
      %v614 = vadd.f32 %v575, %v599
      %v615 = vadd.f32 %v576, %v599
      %v616 = vadd.f32 %v577, %v599
      %v617 = vadd.f32 %v578, %v599
      %v618 = vadd.f32 %v579, %v599
      %v619 = vadd.f32 %v580, %v599
      %v620 = vadd.f32 %v581, %v599
      %v621 = vadd.f32 %v582, %v599
      %v622 = vadd.f32 %v583, %v599
      %v623 = vadd.f32 %v584, %v599
      %v624 = vadd.f32 %v585, %v599
      %v625 = vadd.f32 %v586, %v599
      %v626 = vadd.f32 %v587, %v599
      %v627 = vadd.f32 %v588, %v599
      %v628 = vadd.f32 %v589, %v599
      %v629 = vadd.f32 %v590, %v599
      %v630 = vadd.f32 %v591, %v599
      %v631 = vadd.f32 %v592, %v599
      %v632 = vadd.f32 %v593, %v599
      %vm633 = vcmp.ge.f32.partialorder %v601, 0.0
      %vm634 = vcmp.ge.f32.partialorder %v602, 0.0
      %vm635 = vcmp.ge.f32.partialorder %v603, 0.0
      %vm636 = vcmp.ge.f32.partialorder %v604, 0.0
      %vm637 = vcmp.ge.f32.partialorder %v605, 0.0
      %vm638 = vcmp.ge.f32.partialorder %v606, 0.0
      %vm639 = vcmp.ge.f32.partialorder %v607, 0.0
      %vm640 = vcmp.ge.f32.partialorder %v608, 0.0
      %vm641 = vcmp.ge.f32.partialorder %v609, 0.0
      %vm642 = vcmp.ge.f32.partialorder %v610, 0.0
      %vm643 = vcmp.ge.f32.partialorder %v611, 0.0
      %vm644 = vcmp.ge.f32.partialorder %v612, 0.0
      %vm645 = vcmp.ge.f32.partialorder %v613, 0.0
      %vm646 = vcmp.ge.f32.partialorder %v614, 0.0
      %vm647 = vcmp.ge.f32.partialorder %v615, 0.0
      %vm648 = vcmp.ge.f32.partialorder %v616, 0.0
      %vm649 = vcmp.ge.f32.partialorder %v617, 0.0
      %vm650 = vcmp.ge.f32.partialorder %v618, 0.0
      %vm651 = vcmp.ge.f32.partialorder %v619, 0.0
      %vm652 = vcmp.ge.f32.partialorder %v620, 0.0
      %vm653 = vcmp.ge.f32.partialorder %v621, 0.0
      %vm654 = vcmp.ge.f32.partialorder %v622, 0.0
      %vm655 = vcmp.ge.f32.partialorder %v623, 0.0
      %vm656 = vcmp.ge.f32.partialorder %v624, 0.0
      %vm657 = vcmp.ge.f32.partialorder %v625, 0.0
      %vm658 = vcmp.ge.f32.partialorder %v626, 0.0
      %vm659 = vcmp.ge.f32.partialorder %v627, 0.0
      %vm660 = vcmp.ge.f32.partialorder %v628, 0.0
      %vm661 = vcmp.ge.f32.partialorder %v629, 0.0
      %vm662 = vcmp.ge.f32.partialorder %v630, 0.0
      %vm663 = vcmp.ge.f32.partialorder %v631, 0.0
      %vm664 = vcmp.ge.f32.partialorder %v632, 0.0
      %v665 = vmul.f32 %v601, 0.2
      %v666 = vmul.f32 %v602, 0.2
      %v667 = vmul.f32 %v603, 0.2
      %v668 = vmul.f32 %v604, 0.2
      %v669 = vmul.f32 %v605, 0.2
      %v670 = vmul.f32 %v606, 0.2
      %v671 = vmul.f32 %v607, 0.2
      %v672 = vmul.f32 %v608, 0.2
      %v673 = vmul.f32 %v609, 0.2
      %v674 = vmul.f32 %v610, 0.2
      %v675 = vmul.f32 %v611, 0.2
      %v676 = vmul.f32 %v612, 0.2
      %v677 = vmul.f32 %v613, 0.2
      %v678 = vmul.f32 %v614, 0.2
      %v679 = vmul.f32 %v615, 0.2
      %v680 = vmul.f32 %v616, 0.2
      %v681 = vmul.f32 %v617, 0.2
      %v682 = vmul.f32 %v618, 0.2
      %v683 = vmul.f32 %v619, 0.2
      %v684 = vmul.f32 %v620, 0.2
      %v685 = vmul.f32 %v621, 0.2
      %v686 = vmul.f32 %v622, 0.2
      %v687 = vmul.f32 %v623, 0.2
      %v688 = vmul.f32 %v624, 0.2
      %v689 = vmul.f32 %v625, 0.2
      %v690 = vmul.f32 %v626, 0.2
      %v691 = vmul.f32 %v627, 0.2
      %v692 = vmul.f32 %v628, 0.2
      %v693 = vmul.f32 %v629, 0.2
      %v694 = vmul.f32 %v630, 0.2
      %v695 = vmul.f32 %v631, 0.2
      %v696 = vmul.f32 %v632, 0.2
      %v697 = vsel %vm633, %v601, %v665
      %v698 = vsel %vm634, %v602, %v666
      %v699 = vsel %vm635, %v603, %v667
      %v700 = vsel %vm636, %v604, %v668
      %v701 = vsel %vm637, %v605, %v669
      %v702 = vsel %vm638, %v606, %v670
      %v703 = vsel %vm639, %v607, %v671
      %v704 = vsel %vm640, %v608, %v672
      %v705 = vsel %vm641, %v609, %v673
      %v706 = vsel %vm642, %v610, %v674
      %v707 = vsel %vm643, %v611, %v675
      %v708 = vsel %vm644, %v612, %v676
      %v709 = vsel %vm645, %v613, %v677
      %v710 = vsel %vm646, %v614, %v678
      %v711 = vsel %vm647, %v615, %v679
      %v712 = vsel %vm648, %v616, %v680
      %v713 = vsel %vm649, %v617, %v681
      %v714 = vsel %vm650, %v618, %v682
      %v715 = vsel %vm651, %v619, %v683
      %v716 = vsel %vm652, %v620, %v684
      %v717 = vsel %vm653, %v621, %v685
      %v718 = vsel %vm654, %v622, %v686
      %v719 = vsel %vm655, %v623, %v687
      %v720 = vsel %vm656, %v624, %v688
      %v721 = vsel %vm657, %v625, %v689
      %v722 = vsel %vm658, %v626, %v690
      %v723 = vsel %vm659, %v627, %v691
      %v724 = vsel %vm660, %v628, %v692
      %v725 = vsel %vm661, %v629, %v693
      %v726 = vsel %vm662, %v630, %v694
      %v727 = vsel %vm663, %v631, %v695
      %v728 = vsel %vm664, %v632, %v696
      %v729 = vpack.c.bf16 %v698, %v697
      %v730 = vpack.c.bf16 %v700, %v699
      %v731 = vpack.c.bf16 %v702, %v701
      %v732 = vpack.c.bf16 %v704, %v703
      %v733 = vpack.c.bf16 %v706, %v705
      %v734 = vpack.c.bf16 %v708, %v707
      %v735 = vpack.c.bf16 %v710, %v709
      %v736 = vpack.c.bf16 %v712, %v711
      %v737 = vpack.c.bf16 %v714, %v713
      %v738 = vpack.c.bf16 %v716, %v715
      %v739 = vpack.c.bf16 %v718, %v717
      %v740 = vpack.c.bf16 %v720, %v719
      %v741 = vpack.c.bf16 %v722, %v721
      %v742 = vpack.c.bf16 %v724, %v723
      %v743 = vpack.c.bf16 %v726, %v725
      %v744 = vpack.c.bf16 %v728, %v727
      %v761 = vunpack.c.l.b16 %v729
      %v762 = vunpack.c.h.b16 %v729
      %v763 = vunpack.c.l.b16 %v730
      %v764 = vunpack.c.h.b16 %v730
      %v765 = vunpack.c.l.b16 %v731
      %v766 = vunpack.c.h.b16 %v731
      %v767 = vunpack.c.l.b16 %v732
      %v768 = vunpack.c.h.b16 %v732
      %v769 = vunpack.c.l.b16 %v733
      %v770 = vunpack.c.h.b16 %v733
      %v771 = vunpack.c.l.b16 %v734
      %v772 = vunpack.c.h.b16 %v734
      %v773 = vunpack.c.l.b16 %v735
      %v774 = vunpack.c.h.b16 %v735
      %v775 = vunpack.c.l.b16 %v736
      %v776 = vunpack.c.h.b16 %v736
      %v777 = vunpack.c.l.b16 %v737
      %v778 = vunpack.c.h.b16 %v737
      %v779 = vunpack.c.l.b16 %v738
      %v780 = vunpack.c.h.b16 %v738
      %v781 = vunpack.c.l.b16 %v739
      %v782 = vunpack.c.h.b16 %v739
      %v783 = vunpack.c.l.b16 %v740
      %v784 = vunpack.c.h.b16 %v740
      %v785 = vunpack.c.l.b16 %v741
      %v786 = vunpack.c.h.b16 %v741
      %v787 = vunpack.c.l.b16 %v742
      %v788 = vunpack.c.h.b16 %v742
      %v789 = vunpack.c.l.b16 %v743
      %v790 = vunpack.c.h.b16 %v743
      %v791 = vunpack.c.l.b16 %v744
      %v792 = vunpack.c.h.b16 %v744
      %v793 = vpack.c.b16 %v761, %v761
      %v794 = vpack.c.b16 %v762, %v762
      %v795 = vpack.c.b16 %v763, %v763
      %v796 = vpack.c.b16 %v764, %v764
      %v797 = vpack.c.b16 %v765, %v765
      %v798 = vpack.c.b16 %v766, %v766
      %v799 = vpack.c.b16 %v767, %v767
      %v800 = vpack.c.b16 %v768, %v768
      %v801 = vpack.c.b16 %v769, %v769
      %v802 = vpack.c.b16 %v770, %v770
      %v803 = vpack.c.b16 %v771, %v771
      %v804 = vpack.c.b16 %v772, %v772
      %v805 = vpack.c.b16 %v773, %v773
      %v806 = vpack.c.b16 %v774, %v774
      %v807 = vpack.c.b16 %v775, %v775
      %v808 = vpack.c.b16 %v776, %v776
      %v809 = vpack.c.b16 %v777, %v777
      %v810 = vpack.c.b16 %v778, %v778
      %v811 = vpack.c.b16 %v779, %v779
      %v812 = vpack.c.b16 %v780, %v780
      %v813 = vpack.c.b16 %v781, %v781
      %v814 = vpack.c.b16 %v782, %v782
      %v815 = vpack.c.b16 %v783, %v783
      %v816 = vpack.c.b16 %v784, %v784
      %v817 = vpack.c.b16 %v785, %v785
      %v818 = vpack.c.b16 %v786, %v786
      %v819 = vpack.c.b16 %v787, %v787
      %v820 = vpack.c.b16 %v788, %v788
      %v821 = vpack.c.b16 %v789, %v789
      %v822 = vpack.c.b16 %v790, %v790
      %v823 = vpack.c.b16 %v791, %v791
      %v824 = vpack.c.b16 %v792, %v792
      %857 = vst [vmem:[%s199] sm:$0xf] %v793
      %858 = vst [vmem:[%s199 + $0x4] sm:$0xf] %v794
      %859 = vst [vmem:[%s199 + $0x8] sm:$0xf] %v795
      %860 = vst [vmem:[%s199 + $0xc] sm:$0xf] %v796
      %861 = vst [vmem:[%s199 + $0x10] sm:$0xf] %v797
      %862 = vst [vmem:[%s199 + $0x14] sm:$0xf] %v798
      %863 = vst [vmem:[%s199 + $0x18] sm:$0xf] %v799
      %864 = vst [vmem:[%s199 + $0x1c] sm:$0xf] %v800
      %865 = vst [vmem:[%s199 + $0x20] sm:$0xf] %v801
      %866 = vst [vmem:[%s199 + $0x24] sm:$0xf] %v802
      %867 = vst [vmem:[%s199 + $0x28] sm:$0xf] %v803
      %868 = vst [vmem:[%s199 + $0x2c] sm:$0xf] %v804
      %869 = vst [vmem:[%s199 + $0x30] sm:$0xf] %v805
      %870 = vst [vmem:[%s199 + $0x34] sm:$0xf] %v806
      %871 = vst [vmem:[%s199 + $0x38] sm:$0xf] %v807
      %872 = vst [vmem:[%s199 + $0x3c] sm:$0xf] %v808
      %873 = vst [vmem:[%s199 + $0x40] sm:$0xf] %v809
      %874 = vst [vmem:[%s199 + $0x44] sm:$0xf] %v810
      %875 = vst [vmem:[%s199 + $0x48] sm:$0xf] %v811
      %876 = vst [vmem:[%s199 + $0x4c] sm:$0xf] %v812
      %877 = vst [vmem:[%s199 + $0x50] sm:$0xf] %v813
      %878 = vst [vmem:[%s199 + $0x54] sm:$0xf] %v814
      %879 = vst [vmem:[%s199 + $0x58] sm:$0xf] %v815
      %880 = vst [vmem:[%s199 + $0x5c] sm:$0xf] %v816
      %881 = vst [vmem:[%s199 + $0x60] sm:$0xf] %v817
      %882 = vst [vmem:[%s199 + $0x64] sm:$0xf] %v818
      %883 = vst [vmem:[%s199 + $0x68] sm:$0xf] %v819
      %884 = vst [vmem:[%s199 + $0x6c] sm:$0xf] %v820
      %885 = vst [vmem:[%s199 + $0x70] sm:$0xf] %v821
      %886 = vst [vmem:[%s199 + $0x74] sm:$0xf] %v822
      %887 = vst [vmem:[%s199 + $0x78] sm:$0xf] %v823
      %888 = vst [vmem:[%s199 + $0x7c] sm:$0xf] %v824
      %s889 = smul.u32 32, %s15
      %p890 = scmp.lt.s32.totalorder %s889, 63
      %s891 = scalar_select %p890, %s889, 63
      %s892 = smul.addr %s891, 4
      %s893 = scalar_lea.vmem %s4, %s892
      // Predicated region
      $region37: #{forward.5} parent=35 // pred_check
        %p894 = pneg %p122
      $region38: #{forward.5} parent=35 // pred_check_branch
        %896 = sbr.rel (%p894) target = $region40
      $region39: #{forward.5} parent=35 // pred_region
        %s897 = smul.u32 32, %s15
      $region40: #{forward.5} parent=35 // pred_fallthru
        _
    $region36: #{forward.5} parent=5 // pred_fallthru
      _
    %p898 = scmp.le.s32.totalorder 2, %s10
    // Predicated region
    $region41: #{forward.5} parent=5 // pred_check
      %p899 = pneg %p898
    $region42: #{forward.5} parent=5 // pred_check_branch
      %901 = sbr.rel (%p899) target = $region44
    $region43: #{forward.5} parent=5 // pred_region
      %s902 = ssub.s32 %s10, 2
      // Predicated region
      $region45: #{forward.5} parent=43 // pred_check
        %p903 = pneg %p128
      $region46: #{forward.5} parent=43 // pred_check_branch
        %905 = sbr.rel (%p903) target = $region48
      $region47: #{forward.5} parent=43 // pred_region
        %s906 = smul.u32 32, %s16
        %p907 = scmp.lt.s32.totalorder %s906, 63
        %s908 = scalar_select %p907, %s906, 63
        %s909 = smul.addr %s908, 4
        %s910 = scalar_lea.vmem %s4, %s909
      $region48: #{forward.5} parent=43 // pred_fallthru
        _
    $region44: #{forward.5} parent=5 // pred_fallthru
      _
  $region6: #{forward.5} parent=0 // loop_footer
    %s14 = sadd.s32 1, %s10
  $region7: #{forward.5} parent=0 // loop_footer_branch
    %9 = sbr.rel target = $region3
  $region8: #{forward.5} parent=0 // loop_exit
    _

// kernel: forward.6
$region0: #{forward.6}
  #allocation0 [shape = 'u32[]', space=smem, size = 0x4, offset = 0x4, fixed_abs, tag = 'smem constant byte address 0x4 - core index']
  #allocation1 [shape = 'u32[144,128]{1,0:T(1,128)}', space=vmem, size = 0x12000, scoped, tag = 'internal scratch']
  %s0 = inlined_call_operand.vmem [shape: bf16[128,256], index: 0, kind: input, shape index: {}]
  %s1 = inlined_call_operand.vmem [shape: bf16[256,128], index: 1, kind: input, shape index: {}]
  %s2 = inlined_call_operand.vmem [shape: f32[1,128], index: 2, kind: input, shape index: {}]
  %s3 = inlined_call_operand.vmem [shape: f32[1,128], index: 3, kind: input, shape index: {}]
  %s4 = inlined_call_operand.vmem [shape: bf16[128,128], index: 4, kind: output, shape index: {}]
  %s5 = sld [smem:[#allocation0]]
  $region49: #{forward.6} parent=0
    _
  %s7 = ssub.s32 1, %s5
  %s8 = scalar_select 0, %s7, %s5
  loop: start=0, step=1, limit=4
  $region2: #{forward.6} parent=0 // loop_pre_header
    _
  $region3: #{forward.6} parent=0 // loop_header
    %s10 = sphi 0, %s14
    %p11 = scmp.ge.s32.totalorder %s10, 4
    %s20 = sphi 0, %s22
    %s23 = sphi 0, %s20
    %s24 = sphi 0, %s23
    %s40 = sphi 0, %s24
    %s44 = sphi 0, %s44
    %s46 = sphi 0, %s44
    %s47 = sphi 0, %s46
    %s61 = sphi 0, %s47
    %s65 = sphi 0, %s65
    %s67 = sphi 0, %s65
    %s68 = sphi 0, %s67
    %s82 = sphi 0, %s68
    %s86 = sphi 0, %s86
    %s88 = sphi 0, %s86
    %s89 = sphi 0, %s88
    %s103 = sphi 0, %s89
    %s109 = sphi 0, %s111
    %s112 = sphi 0, %s109
    %s113 = sphi 0, %s112
    %s129 = sphi 0, %s113
  $region4: #{forward.6} parent=0 // loop_header_branch
    %13 = sbr.rel (%p11) target = $region8
  $region5: #{forward.6} parent=0 // loop_body
    %s15 = ssub.s32 %s10, 1
    %s16 = ssub.s32 %s10, 2
    %s17 = sadd.s32 %s10, 1
    %s18 = ssub.s32 %s10, %s17
    %p19 = scmp.eq.s32.totalorder %s18, 0
    %s21 = sadd.s32 %s20, 1
    %s22 = scalar_select %p19, %s20, %s21
    %p25 = pneg %p19
    %p26 = scmp.eq.s32.totalorder %s10, 1
    %p27 = por %p25, %p26
    %p28 = scmp.ne.s32.totalorder %s20, %s23
    %p29 = scmp.eq.s32.totalorder %s10, 0
    %p30 = por %p28, %p29
    %p31 = scmp.ne.s32.totalorder %s20, %s23
    %p32 = scmp.eq.s32.totalorder %s15, 1
    %p33 = por %p31, %p32
    %p34 = scmp.ne.s32.totalorder %s23, %s24
    %p35 = scmp.eq.s32.totalorder %s15, 0
    %p36 = por %p34, %p35
    %p37 = scmp.ne.s32.totalorder %s23, %s24
    %p38 = scmp.eq.s32.totalorder %s16, 1
    %p39 = por %p37, %p38
    %p41 = scmp.ne.s32.totalorder %s24, %s40
    %p42 = scmp.eq.s32.totalorder %s16, 0
    %p43 = por %p41, %p42
    %s45 = sadd.s32 %s44, 1
    %p48 = scmp.eq.s32.totalorder %s10, 1
    %p49 = scmp.ne.s32.totalorder %s44, %s46
    %p50 = scmp.eq.s32.totalorder %s10, 0
    %p51 = por %p49, %p50
    %p52 = scmp.ne.s32.totalorder %s44, %s46
    %p53 = scmp.eq.s32.totalorder %s15, 1
    %p54 = por %p52, %p53
    %p55 = scmp.ne.s32.totalorder %s46, %s47
    %p56 = scmp.eq.s32.totalorder %s15, 0
    %p57 = por %p55, %p56
    %p58 = scmp.ne.s32.totalorder %s46, %s47
    %p59 = scmp.eq.s32.totalorder %s16, 1
    %p60 = por %p58, %p59
    %p62 = scmp.ne.s32.totalorder %s47, %s61
    %p63 = scmp.eq.s32.totalorder %s16, 0
    %p64 = por %p62, %p63
    %s66 = sadd.s32 %s65, 1
    %p69 = scmp.eq.s32.totalorder %s10, 1
    %p70 = scmp.ne.s32.totalorder %s65, %s67
    %p71 = scmp.eq.s32.totalorder %s10, 0
    %p72 = por %p70, %p71
    %p73 = scmp.ne.s32.totalorder %s65, %s67
    %p74 = scmp.eq.s32.totalorder %s15, 1
    %p75 = por %p73, %p74
    %p76 = scmp.ne.s32.totalorder %s67, %s68
    %p77 = scmp.eq.s32.totalorder %s15, 0
    %p78 = por %p76, %p77
    %p79 = scmp.ne.s32.totalorder %s67, %s68
    %p80 = scmp.eq.s32.totalorder %s16, 1
    %p81 = por %p79, %p80
    %p83 = scmp.ne.s32.totalorder %s68, %s82
    %p84 = scmp.eq.s32.totalorder %s16, 0
    %p85 = por %p83, %p84
    %s87 = sadd.s32 %s86, 1
    %p90 = scmp.eq.s32.totalorder %s10, 1
    %p91 = scmp.ne.s32.totalorder %s86, %s88
    %p92 = scmp.eq.s32.totalorder %s10, 0
    %p93 = por %p91, %p92
    %p94 = scmp.ne.s32.totalorder %s86, %s88
    %p95 = scmp.eq.s32.totalorder %s15, 1
    %p96 = por %p94, %p95
    %p97 = scmp.ne.s32.totalorder %s88, %s89
    %p98 = scmp.eq.s32.totalorder %s15, 0
    %p99 = por %p97, %p98
    %p100 = scmp.ne.s32.totalorder %s88, %s89
    %p101 = scmp.eq.s32.totalorder %s16, 1
    %p102 = por %p100, %p101
    %p104 = scmp.ne.s32.totalorder %s89, %s103
    %p105 = scmp.eq.s32.totalorder %s16, 0
    %p106 = por %p104, %p105
    %s107 = ssub.s32 %s10, %s17
    %p108 = scmp.eq.s32.totalorder %s107, 0
    %s110 = sadd.s32 %s109, 1
    %s111 = scalar_select %p108, %s109, %s110
    %p114 = pneg %p108
    %p115 = scmp.eq.s32.totalorder %s10, 1
    %p116 = por %p114, %p115
    %p117 = scmp.ne.s32.totalorder %s109, %s112
    %p118 = scmp.eq.s32.totalorder %s10, 0
    %p119 = por %p117, %p118
    %p120 = scmp.ne.s32.totalorder %s109, %s112
    %p121 = scmp.eq.s32.totalorder %s15, 1
    %p122 = por %p120, %p121
    %p123 = scmp.ne.s32.totalorder %s112, %s113
    %p124 = scmp.eq.s32.totalorder %s15, 0
    %p125 = por %p123, %p124
    %p126 = scmp.ne.s32.totalorder %s112, %s113
    %p127 = scmp.eq.s32.totalorder %s16, 1
    %p128 = por %p126, %p127
    %p130 = scmp.ne.s32.totalorder %s113, %s129
    %p131 = scmp.eq.s32.totalorder %s16, 0
    %p132 = por %p130, %p131
    %p133 = scmp.le.s32.totalorder 1, %s10
    %p134 = scmp.lt.s32.totalorder %s10, 3
    %p135 = pnand %p133, %p134
    %p136 = pneg %p135
    // Predicated region
    $region9: #{forward.6} parent=5 // pred_check
      _
    $region10: #{forward.6} parent=5 // pred_check_branch
      %138 = sbr.rel (%p135) target = $region12
    $region11: #{forward.6} parent=5 // pred_region
      %s139 = ssub.s32 %s10, 1
      // Predicated region
      $region13: #{forward.6} parent=11 // pred_check
        %p140 = pneg %p57
      $region14: #{forward.6} parent=11 // pred_check_branch
        %142 = sbr.rel (%p140) target = $region16
      $region15: #{forward.6} parent=11 // pred_region
        _
      $region16: #{forward.6} parent=11 // pred_fallthru
        _
      // Predicated region
      $region17: #{forward.6} parent=11 // pred_check
        %p143 = pneg %p78
      $region18: #{forward.6} parent=11 // pred_check_branch
        %145 = sbr.rel (%p143) target = $region20
      $region19: #{forward.6} parent=11 // pred_region
        _
      $region20: #{forward.6} parent=11 // pred_fallthru
        _
      // Predicated region
      $region21: #{forward.6} parent=11 // pred_check
        %p146 = pneg %p99
      $region22: #{forward.6} parent=11 // pred_check_branch
        %148 = sbr.rel (%p146) target = $region24
      $region23: #{forward.6} parent=11 // pred_region
        _
      $region24: #{forward.6} parent=11 // pred_fallthru
        _
    $region12: #{forward.6} parent=5 // pred_fallthru
      _
    %p149 = scmp.lt.s32.totalorder %s10, 2
    // Predicated region
    $region25: #{forward.6} parent=5 // pred_check
      %p150 = pneg %p149
    $region26: #{forward.6} parent=5 // pred_check_branch
      %152 = sbr.rel (%p150) target = $region28
    $region27: #{forward.6} parent=5 // pred_region
      // Predicated region
      $region29: #{forward.6} parent=27 // pred_check
        %p153 = pneg %p30
      $region30: #{forward.6} parent=27 // pred_check_branch
        %155 = sbr.rel (%p153) target = $region32
      $region31: #{forward.6} parent=27 // pred_region
        %s156 = smul.u32 8, %s10
        %p157 = scmp.lt.s32.totalorder %s156, 15
        %s158 = scalar_select %p157, %s156, 15
        %s159 = smul.addr %s158, 2
        %s160 = smul.addr %s159, 4
        %s161 = scalar_lea.vmem %s0, %s160
        %s162 = smul.u32 8, %s10
      $region32: #{forward.6} parent=27 // pred_fallthru
        _
    $region28: #{forward.6} parent=5 // pred_fallthru
      _
    %p163 = scmp.le.s32.totalorder 1, %s10
    %p164 = scmp.lt.s32.totalorder %s10, 3
    %p165 = pnand %p163, %p164
    %p166 = pneg %p165
    // Predicated region
    $region33: #{forward.6} parent=5 // pred_check
      _
    $region34: #{forward.6} parent=5 // pred_check_branch
      %168 = sbr.rel (%p165) target = $region36
    $region35: #{forward.6} parent=5 // pred_region
      %s169 = ssub.s32 %s10, 1
      %s170 = smul.u32 8, %s15
      %p171 = scmp.lt.s32.totalorder %s170, 15
      %s172 = scalar_select %p171, %s170, 15
      %s173 = smul.addr %s172, 2
      %s174 = smul.addr %s173, 4
      %s175 = scalar_lea.vmem %s0, %s174
      %p176 = pneg %p36
      %p177 = pneg %p33
      %p178 = pneg %p57
      %p179 = pneg %p54
      %p180 = pneg %p78
      %p181 = pneg %p75
      %p182 = pneg %p99
      %p183 = pneg %p96
      %p184 = pneg %p125
      %p185 = pneg %p122
      %s186 = smul.u32 8, %s15
      %p187 = scmp.lt.s32.totalorder %s186, 15
      %s188 = scalar_select %p187, %s186, 15
      %s189 = smul.addr %s188, 4
      %s190 = scalar_lea.vmem %s4, %s189
      %s191 = smul.u32 8, %s15
      %p192 = scmp.lt.s32.totalorder %s191, 15
      %s193 = scalar_select %p192, %s191, 15
      %s194 = smul.addr %s193, 2
      %s195 = smul.addr %s194, 4
      %s196 = scalar_lea.vmem %s0, %s195
      %s197 = smul.u32 8, %s15
      %s198 = smul.u32 8, %s15
      %p199 = scmp.lt.s32.totalorder %s198, 15
      %s200 = scalar_select %p199, %s198, 15
      %s201 = smul.addr %s200, 4
      %s202 = scalar_lea.vmem %s4, %s201
      %s203 = smul.u32 8, %s15
      %v205 = vld [vmem:[%s196] sm:$0xff]
      %v206 = vld [vmem:[%s196 + $0x8] sm:$0xff]
      %v207 = vld [vmem:[%s196 + $0x10] sm:$0xff]
      %v208 = vld [vmem:[%s196 + $0x18] sm:$0xff]
      %v209 = vld [vmem:[%s196 + $0x20] sm:$0xff]
      %v210 = vld [vmem:[%s196 + $0x28] sm:$0xff]
      %v211 = vld [vmem:[%s196 + $0x30] sm:$0xff]
      %v212 = vld [vmem:[%s196 + $0x38] sm:$0xff]
      %v213 = vld [vmem:[%s1] sm:$0xf]
      %v214 = vld [vmem:[%s1 + $0x4] sm:$0xf]
      %v215 = vld [vmem:[%s1 + $0x8] sm:$0xf]
      %v216 = vld [vmem:[%s1 + $0xc] sm:$0xf]
      %v217 = vld [vmem:[%s1 + $0x10] sm:$0xf]
      %v218 = vld [vmem:[%s1 + $0x14] sm:$0xf]
      %v219 = vld [vmem:[%s1 + $0x18] sm:$0xf]
      %v220 = vld [vmem:[%s1 + $0x1c] sm:$0xf]
      %v221 = vld [vmem:[%s1 + $0x20] sm:$0xf]
      %v222 = vld [vmem:[%s1 + $0x24] sm:$0xf]
      %v223 = vld [vmem:[%s1 + $0x28] sm:$0xf]
      %v224 = vld [vmem:[%s1 + $0x2c] sm:$0xf]
      %v225 = vld [vmem:[%s1 + $0x30] sm:$0xf]
      %v226 = vld [vmem:[%s1 + $0x34] sm:$0xf]
      %v227 = vld [vmem:[%s1 + $0x38] sm:$0xf]
      %v228 = vld [vmem:[%s1 + $0x3c] sm:$0xf]
      %v229 = vld [vmem:[%s1 + $0x40] sm:$0xf]
      %v230 = vld [vmem:[%s1 + $0x44] sm:$0xf]
      %v231 = vld [vmem:[%s1 + $0x48] sm:$0xf]
      %v232 = vld [vmem:[%s1 + $0x4c] sm:$0xf]
      %v233 = vld [vmem:[%s1 + $0x50] sm:$0xf]
      %v234 = vld [vmem:[%s1 + $0x54] sm:$0xf]
      %v235 = vld [vmem:[%s1 + $0x58] sm:$0xf]
      %v236 = vld [vmem:[%s1 + $0x5c] sm:$0xf]
      %v237 = vld [vmem:[%s1 + $0x60] sm:$0xf]
      %v238 = vld [vmem:[%s1 + $0x64] sm:$0xf]
      %v239 = vld [vmem:[%s1 + $0x68] sm:$0xf]
      %v240 = vld [vmem:[%s1 + $0x6c] sm:$0xf]
      %v241 = vld [vmem:[%s1 + $0x70] sm:$0xf]
      %v242 = vld [vmem:[%s1 + $0x74] sm:$0xf]
      %v243 = vld [vmem:[%s1 + $0x78] sm:$0xf]
      %v244 = vld [vmem:[%s1 + $0x7c] sm:$0xf]
      %v253 = vunpack.c.l.b16 %v205
      %v254 = vunpack.c.h.b16 %v205
      %v255 = vunpack.c.l.b16 %v206
      %v256 = vunpack.c.h.b16 %v206
      %v257 = vunpack.c.l.b16 %v207
      %v258 = vunpack.c.h.b16 %v207
      %v259 = vunpack.c.l.b16 %v208
      %v260 = vunpack.c.h.b16 %v208
      %v261 = vunpack.c.l.b16 %v209
      %v262 = vunpack.c.h.b16 %v209
      %v263 = vunpack.c.l.b16 %v210
      %v264 = vunpack.c.h.b16 %v210
      %v265 = vunpack.c.l.b16 %v211
      %v266 = vunpack.c.h.b16 %v211
      %v267 = vunpack.c.l.b16 %v212
      %v268 = vunpack.c.h.b16 %v212
      %v269 = vpack.c.b16 %v255, %v253
      %v270 = vpack.c.b16 %v256, %v254
      %v271 = vpack.c.b16 %v259, %v257
      %v272 = vpack.c.b16 %v260, %v258
      %v273 = vpack.c.b16 %v263, %v261
      %v274 = vpack.c.b16 %v264, %v262
      %v275 = vpack.c.b16 %v267, %v265
      %v276 = vpack.c.b16 %v268, %v266
      %v317 = vunpack.c.l.b16 %v213
      %v318 = vunpack.c.l.b16 %v214
      %v319 = vunpack.c.l.b16 %v215
      %v320 = vunpack.c.l.b16 %v216
      %v321 = vunpack.c.l.b16 %v217
      %v322 = vunpack.c.l.b16 %v218
      %v323 = vunpack.c.l.b16 %v219
      %v324 = vunpack.c.l.b16 %v220
      %v325 = vunpack.c.l.b16 %v221
      %v326 = vunpack.c.l.b16 %v222
      %v327 = vunpack.c.l.b16 %v223
      %v328 = vunpack.c.l.b16 %v224
      %v329 = vunpack.c.l.b16 %v225
      %v330 = vunpack.c.l.b16 %v226
      %v331 = vunpack.c.l.b16 %v227
      %v332 = vunpack.c.l.b16 %v228
      %v333 = vunpack.c.l.b16 %v229
      %v334 = vunpack.c.l.b16 %v230
      %v335 = vunpack.c.l.b16 %v231
      %v336 = vunpack.c.l.b16 %v232
      %v337 = vunpack.c.l.b16 %v233
      %v338 = vunpack.c.l.b16 %v234
      %v339 = vunpack.c.l.b16 %v235
      %v340 = vunpack.c.l.b16 %v236
      %v341 = vunpack.c.l.b16 %v237
      %v342 = vunpack.c.l.b16 %v238
      %v343 = vunpack.c.l.b16 %v239
      %v344 = vunpack.c.l.b16 %v240
      %v345 = vunpack.c.l.b16 %v241
      %v346 = vunpack.c.l.b16 %v242
      %v347 = vunpack.c.l.b16 %v243
      %v348 = vunpack.c.l.b16 %v244
      %v349 = vpack.c.b16 %v318, %v317
      %v350 = vpack.c.b16 %v320, %v319
      %v351 = vpack.c.b16 %v322, %v321
      %v352 = vpack.c.b16 %v324, %v323
      %v353 = vpack.c.b16 %v326, %v325
      %v354 = vpack.c.b16 %v328, %v327
      %v355 = vpack.c.b16 %v330, %v329
      %v356 = vpack.c.b16 %v332, %v331
      %v357 = vpack.c.b16 %v334, %v333
      %v358 = vpack.c.b16 %v336, %v335
      %v359 = vpack.c.b16 %v338, %v337
      %v360 = vpack.c.b16 %v340, %v339
      %v361 = vpack.c.b16 %v342, %v341
      %v362 = vpack.c.b16 %v344, %v343
      %v363 = vpack.c.b16 %v346, %v345
      %v364 = vpack.c.b16 %v348, %v347
      %381 = vmatprep.subr.bf16.mxu0 0
      %382 = vmatpush1.bf16.msra.mxu0 %v349
      %383 = vmatprep.subr.bf16.mxu0 0
      %384 = vmatpush1.bf16.msra.mxu0 %v350
      %385 = vmatprep.subr.bf16.mxu0 0
      %386 = vmatpush1.bf16.msra.mxu0 %v351
      %387 = vmatprep.subr.bf16.mxu0 0
      %388 = vmatpush1.bf16.msra.mxu0 %v352
      %389 = vmatprep.subr.bf16.mxu0 0
      %390 = vmatpush1.bf16.msra.mxu0 %v353
      %391 = vmatprep.subr.bf16.mxu0 0
      %392 = vmatpush1.bf16.msra.mxu0 %v354
      %393 = vmatprep.subr.bf16.mxu0 0
      %394 = vmatpush1.bf16.msra.mxu0 %v355
      %395 = vmatprep.subr.bf16.mxu0 0
      %396 = vmatpush1.bf16.msra.mxu0 %v356
      %397 = vmatprep.subr.bf16.mxu0 0
      %398 = vmatpush1.bf16.msra.mxu0 %v357
      %399 = vmatprep.subr.bf16.mxu0 0
      %400 = vmatpush1.bf16.msra.mxu0 %v358
      %401 = vmatprep.subr.bf16.mxu0 0
      %402 = vmatpush1.bf16.msra.mxu0 %v359
      %403 = vmatprep.subr.bf16.mxu0 0
      %404 = vmatpush1.bf16.msra.mxu0 %v360
      %405 = vmatprep.subr.bf16.mxu0 0
      %406 = vmatpush1.bf16.msra.mxu0 %v361
      %407 = vmatprep.subr.bf16.mxu0 0
      %408 = vmatpush1.bf16.msra.mxu0 %v362
      %409 = vmatprep.subr.bf16.mxu0 0
      %410 = vmatpush1.bf16.msra.mxu0 %v363
      %411 = vmatprep.subr.bf16.mxu0 0
      %412 = vmatpush1.bf16.msra.mxu0 %v364
      %413 = vmatprep.mubr.bf16.mxu0 %v270
      %414 = vmatmul.mubr.bf16.gmra.mrb[0].mxu0 %v269
      %v415 = vpop.f32.mrb[0].mxu0
      %v416 = vadd.f32 0.0, %v415
      %v417 = vpop.f32.mrb[0].mxu0
      %v418 = vpop.f32.mrb[0].mxu0
      %v419 = vadd.f32 0.0, %v418
      %v420 = vpop.f32.mrb[0].mxu0
      %421 = vmatprep.mubr.bf16.mxu0 %v272
      %422 = vmatmul.mubr.bf16.gmra.mrb[0].mxu0 %v271
      %v423 = vpop.f32.mrb[0].mxu0
      %v424 = vadd.f32 0.0, %v423
      %v425 = vpop.f32.mrb[0].mxu0
      %v426 = vpop.f32.mrb[0].mxu0
      %v427 = vadd.f32 0.0, %v426
      %v428 = vpop.f32.mrb[0].mxu0
      %429 = vmatprep.mubr.bf16.mxu0 %v274
      %430 = vmatmul.mubr.bf16.gmra.mrb[0].mxu0 %v273
      %v431 = vpop.f32.mrb[0].mxu0
      %v432 = vadd.f32 0.0, %v431
      %v433 = vpop.f32.mrb[0].mxu0
      %v434 = vpop.f32.mrb[0].mxu0
      %v435 = vadd.f32 0.0, %v434
      %v436 = vpop.f32.mrb[0].mxu0
      %437 = vmatprep.mubr.bf16.mxu0 %v276
      %438 = vmatmul.mubr.bf16.gmra.mrb[0].mxu0 %v275
      %v439 = vpop.f32.mrb[0].mxu0
      %v440 = vadd.f32 0.0, %v439
      %v441 = vpop.f32.mrb[0].mxu0
      %v442 = vpop.f32.mrb[0].mxu0
      %v443 = vadd.f32 0.0, %v442
      %v444 = vpop.f32.mrb[0].mxu0
      %445 = vdwg.mxu0
      %v446 = vld [vmem:[%s2] sm:$0x1]
      %v448 = vlaneseq
      %v449 = vshrl.u32 %v448, 7
      %v450 = vsub.s32 0, %v449
      %v451 = vrot.slane %v446, %v450
      %v453 = vmul.f32 %v416, %v451
      %v454 = vmul.f32 %v419, %v451
      %v455 = vmul.f32 %v424, %v451
      %v456 = vmul.f32 %v427, %v451
      %v457 = vmul.f32 %v432, %v451
      %v458 = vmul.f32 %v435, %v451
      %v459 = vmul.f32 %v440, %v451
      %v460 = vmul.f32 %v443, %v451
      %v461 = vld [vmem:[%s3] sm:$0x1]
      %v463 = vlaneseq
      %v464 = vshrl.u32 %v463, 7
      %v465 = vsub.s32 0, %v464
      %v466 = vrot.slane %v461, %v465
      %v468 = vadd.f32 %v453, %v466
      %v469 = vadd.f32 %v454, %v466
      %v470 = vadd.f32 %v455, %v466
      %v471 = vadd.f32 %v456, %v466
      %v472 = vadd.f32 %v457, %v466
      %v473 = vadd.f32 %v458, %v466
      %v474 = vadd.f32 %v459, %v466
      %v475 = vadd.f32 %v460, %v466
      %vm476 = vcmp.ge.f32.partialorder %v468, 0.0
      %vm477 = vcmp.ge.f32.partialorder %v469, 0.0
      %vm478 = vcmp.ge.f32.partialorder %v470, 0.0
      %vm479 = vcmp.ge.f32.partialorder %v471, 0.0
      %vm480 = vcmp.ge.f32.partialorder %v472, 0.0
      %vm481 = vcmp.ge.f32.partialorder %v473, 0.0
      %vm482 = vcmp.ge.f32.partialorder %v474, 0.0
      %vm483 = vcmp.ge.f32.partialorder %v475, 0.0
      %v484 = vmul.f32 %v468, 0.2
      %v485 = vmul.f32 %v469, 0.2
      %v486 = vmul.f32 %v470, 0.2
      %v487 = vmul.f32 %v471, 0.2
      %v488 = vmul.f32 %v472, 0.2
      %v489 = vmul.f32 %v473, 0.2
      %v490 = vmul.f32 %v474, 0.2
      %v491 = vmul.f32 %v475, 0.2
      %v492 = vsel %vm476, %v468, %v484
      %v493 = vsel %vm477, %v469, %v485
      %v494 = vsel %vm478, %v470, %v486
      %v495 = vsel %vm479, %v471, %v487
      %v496 = vsel %vm480, %v472, %v488
      %v497 = vsel %vm481, %v473, %v489
      %v498 = vsel %vm482, %v474, %v490
      %v499 = vsel %vm483, %v475, %v491
      %v500 = vpack.c.bf16 %v493, %v492
      %v501 = vpack.c.bf16 %v495, %v494
      %v502 = vpack.c.bf16 %v497, %v496
      %v503 = vpack.c.bf16 %v499, %v498
      %v508 = vunpack.c.l.b16 %v500
      %v509 = vunpack.c.h.b16 %v500
      %v510 = vunpack.c.l.b16 %v501
      %v511 = vunpack.c.h.b16 %v501
      %v512 = vunpack.c.l.b16 %v502
      %v513 = vunpack.c.h.b16 %v502
      %v514 = vunpack.c.l.b16 %v503
      %v515 = vunpack.c.h.b16 %v503
      %v516 = vpack.c.b16 %v508, %v508
      %v517 = vpack.c.b16 %v509, %v509
      %v518 = vpack.c.b16 %v510, %v510
      %v519 = vpack.c.b16 %v511, %v511
      %v520 = vpack.c.b16 %v512, %v512
      %v521 = vpack.c.b16 %v513, %v513
      %v522 = vpack.c.b16 %v514, %v514
      %v523 = vpack.c.b16 %v515, %v515
      %532 = vst [vmem:[%s202] sm:$0xf] %v516
      %533 = vst [vmem:[%s202 + $0x4] sm:$0xf] %v517
      %534 = vst [vmem:[%s202 + $0x8] sm:$0xf] %v518
      %535 = vst [vmem:[%s202 + $0xc] sm:$0xf] %v519
      %536 = vst [vmem:[%s202 + $0x10] sm:$0xf] %v520
      %537 = vst [vmem:[%s202 + $0x14] sm:$0xf] %v521
      %538 = vst [vmem:[%s202 + $0x18] sm:$0xf] %v522
      %539 = vst [vmem:[%s202 + $0x1c] sm:$0xf] %v523
      %s540 = smul.u32 8, %s15
      %p541 = scmp.lt.s32.totalorder %s540, 15
      %s542 = scalar_select %p541, %s540, 15
      %s543 = smul.addr %s542, 4
      %s544 = scalar_lea.vmem %s4, %s543
      // Predicated region
      $region37: #{forward.6} parent=35 // pred_check
        %p545 = pneg %p122
      $region38: #{forward.6} parent=35 // pred_check_branch
        %547 = sbr.rel (%p545) target = $region40
      $region39: #{forward.6} parent=35 // pred_region
        %s548 = smul.u32 8, %s15
      $region40: #{forward.6} parent=35 // pred_fallthru
        _
    $region36: #{forward.6} parent=5 // pred_fallthru
      _
    %p549 = scmp.le.s32.totalorder 2, %s10
    // Predicated region
    $region41: #{forward.6} parent=5 // pred_check
      %p550 = pneg %p549
    $region42: #{forward.6} parent=5 // pred_check_branch
      %552 = sbr.rel (%p550) target = $region44
    $region43: #{forward.6} parent=5 // pred_region
      %s553 = ssub.s32 %s10, 2
      // Predicated region
      $region45: #{forward.6} parent=43 // pred_check
        %p554 = pneg %p128
      $region46: #{forward.6} parent=43 // pred_check_branch
        %556 = sbr.rel (%p554) target = $region48
      $region47: #{forward.6} parent=43 // pred_region
        %s557 = smul.u32 8, %s16
        %p558 = scmp.lt.s32.totalorder %s557, 15
        %s559 = scalar_select %p558, %s557, 15
        %s560 = smul.addr %s559, 4
        %s561 = scalar_lea.vmem %s4, %s560
      $region48: #{forward.6} parent=43 // pred_fallthru
        _
    $region44: #{forward.6} parent=5 // pred_fallthru
      _
  $region6: #{forward.6} parent=0 // loop_footer
    %s14 = sadd.s32 1, %s10
  $region7: #{forward.6} parent=0 // loop_footer_branch
    %9 = sbr.rel target = $region3
  $region8: #{forward.6} parent=0 // loop_exit
    _

// kernel: forward.7
$region0: #{forward.7}
  #allocation0 [shape = 'u32[]', space=smem, size = 0x4, offset = 0x4, fixed_abs, tag = 'smem constant byte address 0x4 - core index']
  #allocation1 [shape = 'u32[144,128]{1,0:T(1,128)}', space=vmem, size = 0x12000, scoped, tag = 'internal scratch']
  %s0 = inlined_call_operand.vmem [shape: bf16[32,512], index: 0, kind: input, shape index: {}]
  %s1 = inlined_call_operand.vmem [shape: bf16[512,128], index: 1, kind: input, shape index: {}]
  %s2 = inlined_call_operand.vmem [shape: f32[1,128], index: 2, kind: input, shape index: {}]
  %s3 = inlined_call_operand.vmem [shape: f32[1,128], index: 3, kind: input, shape index: {}]
  %s4 = inlined_call_operand.vmem [shape: bf16[32,128], index: 4, kind: output, shape index: {}]
  %s5 = sld [smem:[#allocation0]]
  $region49: #{forward.7} parent=0
    _
  %s7 = ssub.s32 1, %s5
  %s8 = scalar_select 0, %s7, %s5
  loop: start=0, step=1, limit=4
  $region2: #{forward.7} parent=0 // loop_pre_header
    _
  $region3: #{forward.7} parent=0 // loop_header
    %s10 = sphi 0, %s14
    %p11 = scmp.ge.s32.totalorder %s10, 4
    %s20 = sphi 0, %s22
    %s23 = sphi 0, %s20
    %s24 = sphi 0, %s23
    %s40 = sphi 0, %s24
    %s44 = sphi 0, %s44
    %s46 = sphi 0, %s44
    %s47 = sphi 0, %s46
    %s61 = sphi 0, %s47
    %s65 = sphi 0, %s65
    %s67 = sphi 0, %s65
    %s68 = sphi 0, %s67
    %s82 = sphi 0, %s68
    %s86 = sphi 0, %s86
    %s88 = sphi 0, %s86
    %s89 = sphi 0, %s88
    %s103 = sphi 0, %s89
    %s109 = sphi 0, %s111
    %s112 = sphi 0, %s109
    %s113 = sphi 0, %s112
    %s129 = sphi 0, %s113
  $region4: #{forward.7} parent=0 // loop_header_branch
    %13 = sbr.rel (%p11) target = $region8
  $region5: #{forward.7} parent=0 // loop_body
    %s15 = ssub.s32 %s10, 1
    %s16 = ssub.s32 %s10, 2
    %s17 = sadd.s32 %s10, 1
    %s18 = ssub.s32 %s10, %s17
    %p19 = scmp.eq.s32.totalorder %s18, 0
    %s21 = sadd.s32 %s20, 1
    %s22 = scalar_select %p19, %s20, %s21
    %p25 = pneg %p19
    %p26 = scmp.eq.s32.totalorder %s10, 1
    %p27 = por %p25, %p26
    %p28 = scmp.ne.s32.totalorder %s20, %s23
    %p29 = scmp.eq.s32.totalorder %s10, 0
    %p30 = por %p28, %p29
    %p31 = scmp.ne.s32.totalorder %s20, %s23
    %p32 = scmp.eq.s32.totalorder %s15, 1
    %p33 = por %p31, %p32
    %p34 = scmp.ne.s32.totalorder %s23, %s24
    %p35 = scmp.eq.s32.totalorder %s15, 0
    %p36 = por %p34, %p35
    %p37 = scmp.ne.s32.totalorder %s23, %s24
    %p38 = scmp.eq.s32.totalorder %s16, 1
    %p39 = por %p37, %p38
    %p41 = scmp.ne.s32.totalorder %s24, %s40
    %p42 = scmp.eq.s32.totalorder %s16, 0
    %p43 = por %p41, %p42
    %s45 = sadd.s32 %s44, 1
    %p48 = scmp.eq.s32.totalorder %s10, 1
    %p49 = scmp.ne.s32.totalorder %s44, %s46
    %p50 = scmp.eq.s32.totalorder %s10, 0
    %p51 = por %p49, %p50
    %p52 = scmp.ne.s32.totalorder %s44, %s46
    %p53 = scmp.eq.s32.totalorder %s15, 1
    %p54 = por %p52, %p53
    %p55 = scmp.ne.s32.totalorder %s46, %s47
    %p56 = scmp.eq.s32.totalorder %s15, 0
    %p57 = por %p55, %p56
    %p58 = scmp.ne.s32.totalorder %s46, %s47
    %p59 = scmp.eq.s32.totalorder %s16, 1
    %p60 = por %p58, %p59
    %p62 = scmp.ne.s32.totalorder %s47, %s61
    %p63 = scmp.eq.s32.totalorder %s16, 0
    %p64 = por %p62, %p63
    %s66 = sadd.s32 %s65, 1
    %p69 = scmp.eq.s32.totalorder %s10, 1
    %p70 = scmp.ne.s32.totalorder %s65, %s67
    %p71 = scmp.eq.s32.totalorder %s10, 0
    %p72 = por %p70, %p71
    %p73 = scmp.ne.s32.totalorder %s65, %s67
    %p74 = scmp.eq.s32.totalorder %s15, 1
    %p75 = por %p73, %p74
    %p76 = scmp.ne.s32.totalorder %s67, %s68
    %p77 = scmp.eq.s32.totalorder %s15, 0
    %p78 = por %p76, %p77
    %p79 = scmp.ne.s32.totalorder %s67, %s68
    %p80 = scmp.eq.s32.totalorder %s16, 1
    %p81 = por %p79, %p80
    %p83 = scmp.ne.s32.totalorder %s68, %s82
    %p84 = scmp.eq.s32.totalorder %s16, 0
    %p85 = por %p83, %p84
    %s87 = sadd.s32 %s86, 1
    %p90 = scmp.eq.s32.totalorder %s10, 1
    %p91 = scmp.ne.s32.totalorder %s86, %s88
    %p92 = scmp.eq.s32.totalorder %s10, 0
    %p93 = por %p91, %p92
    %p94 = scmp.ne.s32.totalorder %s86, %s88
    %p95 = scmp.eq.s32.totalorder %s15, 1
    %p96 = por %p94, %p95
    %p97 = scmp.ne.s32.totalorder %s88, %s89
    %p98 = scmp.eq.s32.totalorder %s15, 0
    %p99 = por %p97, %p98
    %p100 = scmp.ne.s32.totalorder %s88, %s89
    %p101 = scmp.eq.s32.totalorder %s16, 1
    %p102 = por %p100, %p101
    %p104 = scmp.ne.s32.totalorder %s89, %s103
    %p105 = scmp.eq.s32.totalorder %s16, 0
    %p106 = por %p104, %p105
    %s107 = ssub.s32 %s10, %s17
    %p108 = scmp.eq.s32.totalorder %s107, 0
    %s110 = sadd.s32 %s109, 1
    %s111 = scalar_select %p108, %s109, %s110
    %p114 = pneg %p108
    %p115 = scmp.eq.s32.totalorder %s10, 1
    %p116 = por %p114, %p115
    %p117 = scmp.ne.s32.totalorder %s109, %s112
    %p118 = scmp.eq.s32.totalorder %s10, 0
    %p119 = por %p117, %p118
    %p120 = scmp.ne.s32.totalorder %s109, %s112
    %p121 = scmp.eq.s32.totalorder %s15, 1
    %p122 = por %p120, %p121
    %p123 = scmp.ne.s32.totalorder %s112, %s113
    %p124 = scmp.eq.s32.totalorder %s15, 0
    %p125 = por %p123, %p124
    %p126 = scmp.ne.s32.totalorder %s112, %s113
    %p127 = scmp.eq.s32.totalorder %s16, 1
    %p128 = por %p126, %p127
    %p130 = scmp.ne.s32.totalorder %s113, %s129
    %p131 = scmp.eq.s32.totalorder %s16, 0
    %p132 = por %p130, %p131
    %p133 = scmp.le.s32.totalorder 1, %s10
    %p134 = scmp.lt.s32.totalorder %s10, 3
    %p135 = pnand %p133, %p134
    %p136 = pneg %p135
    // Predicated region
    $region9: #{forward.7} parent=5 // pred_check
      _
    $region10: #{forward.7} parent=5 // pred_check_branch
      %138 = sbr.rel (%p135) target = $region12
    $region11: #{forward.7} parent=5 // pred_region
      %s139 = ssub.s32 %s10, 1
      // Predicated region
      $region13: #{forward.7} parent=11 // pred_check
        %p140 = pneg %p57
      $region14: #{forward.7} parent=11 // pred_check_branch
        %142 = sbr.rel (%p140) target = $region16
      $region15: #{forward.7} parent=11 // pred_region
        _
      $region16: #{forward.7} parent=11 // pred_fallthru
        _
      // Predicated region
      $region17: #{forward.7} parent=11 // pred_check
        %p143 = pneg %p78
      $region18: #{forward.7} parent=11 // pred_check_branch
        %145 = sbr.rel (%p143) target = $region20
      $region19: #{forward.7} parent=11 // pred_region
        _
      $region20: #{forward.7} parent=11 // pred_fallthru
        _
      // Predicated region
      $region21: #{forward.7} parent=11 // pred_check
        %p146 = pneg %p99
      $region22: #{forward.7} parent=11 // pred_check_branch
        %148 = sbr.rel (%p146) target = $region24
      $region23: #{forward.7} parent=11 // pred_region
        _
      $region24: #{forward.7} parent=11 // pred_fallthru
        _
    $region12: #{forward.7} parent=5 // pred_fallthru
      _
    %p149 = scmp.lt.s32.totalorder %s10, 2
    // Predicated region
    $region25: #{forward.7} parent=5 // pred_check
      %p150 = pneg %p149
    $region26: #{forward.7} parent=5 // pred_check_branch
      %152 = sbr.rel (%p150) target = $region28
    $region27: #{forward.7} parent=5 // pred_region
      // Predicated region
      $region29: #{forward.7} parent=27 // pred_check
        %p153 = pneg %p30
      $region30: #{forward.7} parent=27 // pred_check_branch
        %155 = sbr.rel (%p153) target = $region32
      $region31: #{forward.7} parent=27 // pred_region
        %s156 = smul.u32 2, %s10
        %p157 = scmp.lt.s32.totalorder %s156, 3
        %s158 = scalar_select %p157, %s156, 3
        %s159 = smul.addr %s158, 4
        %s160 = smul.addr %s159, 4
        %s161 = scalar_lea.vmem %s0, %s160
        %s162 = smul.u32 2, %s10
      $region32: #{forward.7} parent=27 // pred_fallthru
        _
    $region28: #{forward.7} parent=5 // pred_fallthru
      _
    %p163 = scmp.le.s32.totalorder 1, %s10
    %p164 = scmp.lt.s32.totalorder %s10, 3
    %p165 = pnand %p163, %p164
    %p166 = pneg %p165
    // Predicated region
    $region33: #{forward.7} parent=5 // pred_check
      _
    $region34: #{forward.7} parent=5 // pred_check_branch
      %168 = sbr.rel (%p165) target = $region36
    $region35: #{forward.7} parent=5 // pred_region
      %s169 = ssub.s32 %s10, 1
      %s170 = smul.u32 2, %s15
      %p171 = scmp.lt.s32.totalorder %s170, 3
      %s172 = scalar_select %p171, %s170, 3
      %s173 = smul.addr %s172, 4
      %s174 = smul.addr %s173, 4
      %s175 = scalar_lea.vmem %s0, %s174
      %p176 = pneg %p36
      %p177 = pneg %p33
      %p178 = pneg %p57
      %p179 = pneg %p54
      %p180 = pneg %p78
      %p181 = pneg %p75
      %p182 = pneg %p99
      %p183 = pneg %p96
      %p184 = pneg %p125
      %p185 = pneg %p122
      %s186 = smul.u32 2, %s15
      %p187 = scmp.lt.s32.totalorder %s186, 3
      %s188 = scalar_select %p187, %s186, 3
      %s189 = smul.addr %s188, 4
      %s190 = scalar_lea.vmem %s4, %s189
      %s191 = smul.u32 2, %s15
      %p192 = scmp.lt.s32.totalorder %s191, 3
      %s193 = scalar_select %p192, %s191, 3
      %s194 = smul.addr %s193, 4
      %s195 = smul.addr %s194, 4
      %s196 = scalar_lea.vmem %s0, %s195
      %s197 = smul.u32 2, %s15
      %s198 = smul.u32 2, %s15
      %p199 = scmp.lt.s32.totalorder %s198, 3
      %s200 = scalar_select %p199, %s198, 3
      %s201 = smul.addr %s200, 4
      %s202 = scalar_lea.vmem %s4, %s201
      %s203 = smul.u32 2, %s15
      %v205 = vld [vmem:[%s196] sm:$0xff]
      %v206 = vld [vmem:[%s196 + $0x8] sm:$0xff]
      %v207 = vld [vmem:[%s196 + $0x10] sm:$0xff]
      %v208 = vld [vmem:[%s196 + $0x18] sm:$0xff]
      %v209 = vld [vmem:[%s1] sm:$0xf]
      %v210 = vld [vmem:[%s1 + $0x4] sm:$0xf]
      %v211 = vld [vmem:[%s1 + $0x8] sm:$0xf]
      %v212 = vld [vmem:[%s1 + $0xc] sm:$0xf]
      %v213 = vld [vmem:[%s1 + $0x10] sm:$0xf]
      %v214 = vld [vmem:[%s1 + $0x14] sm:$0xf]
      %v215 = vld [vmem:[%s1 + $0x18] sm:$0xf]
      %v216 = vld [vmem:[%s1 + $0x1c] sm:$0xf]
      %v217 = vld [vmem:[%s1 + $0x20] sm:$0xf]
      %v218 = vld [vmem:[%s1 + $0x24] sm:$0xf]
      %v219 = vld [vmem:[%s1 + $0x28] sm:$0xf]
      %v220 = vld [vmem:[%s1 + $0x2c] sm:$0xf]
      %v221 = vld [vmem:[%s1 + $0x30] sm:$0xf]
      %v222 = vld [vmem:[%s1 + $0x34] sm:$0xf]
      %v223 = vld [vmem:[%s1 + $0x38] sm:$0xf]
      %v224 = vld [vmem:[%s1 + $0x3c] sm:$0xf]
      %v225 = vld [vmem:[%s1 + $0x40] sm:$0xf]
      %v226 = vld [vmem:[%s1 + $0x44] sm:$0xf]
      %v227 = vld [vmem:[%s1 + $0x48] sm:$0xf]
      %v228 = vld [vmem:[%s1 + $0x4c] sm:$0xf]
      %v229 = vld [vmem:[%s1 + $0x50] sm:$0xf]
      %v230 = vld [vmem:[%s1 + $0x54] sm:$0xf]
      %v231 = vld [vmem:[%s1 + $0x58] sm:$0xf]
      %v232 = vld [vmem:[%s1 + $0x5c] sm:$0xf]
      %v233 = vld [vmem:[%s1 + $0x60] sm:$0xf]
      %v234 = vld [vmem:[%s1 + $0x64] sm:$0xf]
      %v235 = vld [vmem:[%s1 + $0x68] sm:$0xf]
      %v236 = vld [vmem:[%s1 + $0x6c] sm:$0xf]
      %v237 = vld [vmem:[%s1 + $0x70] sm:$0xf]
      %v238 = vld [vmem:[%s1 + $0x74] sm:$0xf]
      %v239 = vld [vmem:[%s1 + $0x78] sm:$0xf]
      %v240 = vld [vmem:[%s1 + $0x7c] sm:$0xf]
      %v241 = vld [vmem:[%s1 + $0x80] sm:$0xf]
      %v242 = vld [vmem:[%s1 + $0x84] sm:$0xf]
      %v243 = vld [vmem:[%s1 + $0x88] sm:$0xf]
      %v244 = vld [vmem:[%s1 + $0x8c] sm:$0xf]
      %v245 = vld [vmem:[%s1 + $0x90] sm:$0xf]
      %v246 = vld [vmem:[%s1 + $0x94] sm:$0xf]
      %v247 = vld [vmem:[%s1 + $0x98] sm:$0xf]
      %v248 = vld [vmem:[%s1 + $0x9c] sm:$0xf]
      %v249 = vld [vmem:[%s1 + $0xa0] sm:$0xf]
      %v250 = vld [vmem:[%s1 + $0xa4] sm:$0xf]
      %v251 = vld [vmem:[%s1 + $0xa8] sm:$0xf]
      %v252 = vld [vmem:[%s1 + $0xac] sm:$0xf]
      %v253 = vld [vmem:[%s1 + $0xb0] sm:$0xf]
      %v254 = vld [vmem:[%s1 + $0xb4] sm:$0xf]
      %v255 = vld [vmem:[%s1 + $0xb8] sm:$0xf]
      %v256 = vld [vmem:[%s1 + $0xbc] sm:$0xf]
      %v257 = vld [vmem:[%s1 + $0xc0] sm:$0xf]
      %v258 = vld [vmem:[%s1 + $0xc4] sm:$0xf]
      %v259 = vld [vmem:[%s1 + $0xc8] sm:$0xf]
      %v260 = vld [vmem:[%s1 + $0xcc] sm:$0xf]
      %v261 = vld [vmem:[%s1 + $0xd0] sm:$0xf]
      %v262 = vld [vmem:[%s1 + $0xd4] sm:$0xf]
      %v263 = vld [vmem:[%s1 + $0xd8] sm:$0xf]
      %v264 = vld [vmem:[%s1 + $0xdc] sm:$0xf]
      %v265 = vld [vmem:[%s1 + $0xe0] sm:$0xf]
      %v266 = vld [vmem:[%s1 + $0xe4] sm:$0xf]
      %v267 = vld [vmem:[%s1 + $0xe8] sm:$0xf]
      %v268 = vld [vmem:[%s1 + $0xec] sm:$0xf]
      %v269 = vld [vmem:[%s1 + $0xf0] sm:$0xf]
      %v270 = vld [vmem:[%s1 + $0xf4] sm:$0xf]
      %v271 = vld [vmem:[%s1 + $0xf8] sm:$0xf]
      %v272 = vld [vmem:[%s1 + $0xfc] sm:$0xf]
      %v277 = vunpack.c.l.b16 %v205
      %v278 = vunpack.c.h.b16 %v205
      %v279 = vunpack.c.l.b16 %v206
      %v280 = vunpack.c.h.b16 %v206
      %v281 = vunpack.c.l.b16 %v207
      %v282 = vunpack.c.h.b16 %v207
      %v283 = vunpack.c.l.b16 %v208
      %v284 = vunpack.c.h.b16 %v208
      %v285 = vpack.c.b16 %v281, %v277
      %v286 = vpack.c.b16 %v282, %v278
      %v287 = vpack.c.b16 %v283, %v279
      %v288 = vpack.c.b16 %v284, %v280
      %v357 = vunpack.c.l.b16 %v209
      %v358 = vunpack.c.l.b16 %v210
      %v359 = vunpack.c.l.b16 %v211
      %v360 = vunpack.c.l.b16 %v212
      %v361 = vunpack.c.l.b16 %v213
      %v362 = vunpack.c.l.b16 %v214
      %v363 = vunpack.c.l.b16 %v215
      %v364 = vunpack.c.l.b16 %v216
      %v365 = vunpack.c.l.b16 %v217
      %v366 = vunpack.c.l.b16 %v218
      %v367 = vunpack.c.l.b16 %v219
      %v368 = vunpack.c.l.b16 %v220
      %v369 = vunpack.c.l.b16 %v221
      %v370 = vunpack.c.l.b16 %v222
      %v371 = vunpack.c.l.b16 %v223
      %v372 = vunpack.c.l.b16 %v224
      %v373 = vunpack.c.l.b16 %v225
      %v374 = vunpack.c.l.b16 %v226
      %v375 = vunpack.c.l.b16 %v227
      %v376 = vunpack.c.l.b16 %v228
      %v377 = vunpack.c.l.b16 %v229
      %v378 = vunpack.c.l.b16 %v230
      %v379 = vunpack.c.l.b16 %v231
      %v380 = vunpack.c.l.b16 %v232
      %v381 = vunpack.c.l.b16 %v233
      %v382 = vunpack.c.l.b16 %v234
      %v383 = vunpack.c.l.b16 %v235
      %v384 = vunpack.c.l.b16 %v236
      %v385 = vunpack.c.l.b16 %v237
      %v386 = vunpack.c.l.b16 %v238
      %v387 = vunpack.c.l.b16 %v239
      %v388 = vunpack.c.l.b16 %v240
      %v389 = vunpack.c.l.b16 %v241
      %v390 = vunpack.c.l.b16 %v242
      %v391 = vunpack.c.l.b16 %v243
      %v392 = vunpack.c.l.b16 %v244
      %v393 = vunpack.c.l.b16 %v245
      %v394 = vunpack.c.l.b16 %v246
      %v395 = vunpack.c.l.b16 %v247
      %v396 = vunpack.c.l.b16 %v248
      %v397 = vunpack.c.l.b16 %v249
      %v398 = vunpack.c.l.b16 %v250
      %v399 = vunpack.c.l.b16 %v251
      %v400 = vunpack.c.l.b16 %v252
      %v401 = vunpack.c.l.b16 %v253
      %v402 = vunpack.c.l.b16 %v254
      %v403 = vunpack.c.l.b16 %v255
      %v404 = vunpack.c.l.b16 %v256
      %v405 = vunpack.c.l.b16 %v257
      %v406 = vunpack.c.l.b16 %v258
      %v407 = vunpack.c.l.b16 %v259
      %v408 = vunpack.c.l.b16 %v260
      %v409 = vunpack.c.l.b16 %v261
      %v410 = vunpack.c.l.b16 %v262
      %v411 = vunpack.c.l.b16 %v263
      %v412 = vunpack.c.l.b16 %v264
      %v413 = vunpack.c.l.b16 %v265
      %v414 = vunpack.c.l.b16 %v266
      %v415 = vunpack.c.l.b16 %v267
      %v416 = vunpack.c.l.b16 %v268
      %v417 = vunpack.c.l.b16 %v269
      %v418 = vunpack.c.l.b16 %v270
      %v419 = vunpack.c.l.b16 %v271
      %v420 = vunpack.c.l.b16 %v272
      %v421 = vpack.c.b16 %v358, %v357
      %v422 = vpack.c.b16 %v360, %v359
      %v423 = vpack.c.b16 %v362, %v361
      %v424 = vpack.c.b16 %v364, %v363
      %v425 = vpack.c.b16 %v366, %v365
      %v426 = vpack.c.b16 %v368, %v367
      %v427 = vpack.c.b16 %v370, %v369
      %v428 = vpack.c.b16 %v372, %v371
      %v429 = vpack.c.b16 %v374, %v373
      %v430 = vpack.c.b16 %v376, %v375
      %v431 = vpack.c.b16 %v378, %v377
      %v432 = vpack.c.b16 %v380, %v379
      %v433 = vpack.c.b16 %v382, %v381
      %v434 = vpack.c.b16 %v384, %v383
      %v435 = vpack.c.b16 %v386, %v385
      %v436 = vpack.c.b16 %v388, %v387
      %v437 = vpack.c.b16 %v390, %v389
      %v438 = vpack.c.b16 %v392, %v391
      %v439 = vpack.c.b16 %v394, %v393
      %v440 = vpack.c.b16 %v396, %v395
      %v441 = vpack.c.b16 %v398, %v397
      %v442 = vpack.c.b16 %v400, %v399
      %v443 = vpack.c.b16 %v402, %v401
      %v444 = vpack.c.b16 %v404, %v403
      %v445 = vpack.c.b16 %v406, %v405
      %v446 = vpack.c.b16 %v408, %v407
      %v447 = vpack.c.b16 %v410, %v409
      %v448 = vpack.c.b16 %v412, %v411
      %v449 = vpack.c.b16 %v414, %v413
      %v450 = vpack.c.b16 %v416, %v415
      %v451 = vpack.c.b16 %v418, %v417
      %v452 = vpack.c.b16 %v420, %v419
      %485 = vmatprep.subr.bf16.mxu0 0
      %486 = vmatpush1.bf16.msra.mxu0 %v421
      %487 = vmatprep.subr.bf16.mxu0 0
      %488 = vmatpush1.bf16.msra.mxu0 %v422
      %489 = vmatprep.subr.bf16.mxu0 0
      %490 = vmatpush1.bf16.msra.mxu0 %v423
      %491 = vmatprep.subr.bf16.mxu0 0
      %492 = vmatpush1.bf16.msra.mxu0 %v424
      %493 = vmatprep.subr.bf16.mxu0 0
      %494 = vmatpush1.bf16.msra.mxu0 %v425
      %495 = vmatprep.subr.bf16.mxu0 0
      %496 = vmatpush1.bf16.msra.mxu0 %v426
      %497 = vmatprep.subr.bf16.mxu0 0
      %498 = vmatpush1.bf16.msra.mxu0 %v427
      %499 = vmatprep.subr.bf16.mxu0 0
      %500 = vmatpush1.bf16.msra.mxu0 %v428
      %501 = vmatprep.subr.bf16.mxu0 0
      %502 = vmatpush1.bf16.msra.mxu0 %v429
      %503 = vmatprep.subr.bf16.mxu0 0
      %504 = vmatpush1.bf16.msra.mxu0 %v430
      %505 = vmatprep.subr.bf16.mxu0 0
      %506 = vmatpush1.bf16.msra.mxu0 %v431
      %507 = vmatprep.subr.bf16.mxu0 0
      %508 = vmatpush1.bf16.msra.mxu0 %v432
      %509 = vmatprep.subr.bf16.mxu0 0
      %510 = vmatpush1.bf16.msra.mxu0 %v433
      %511 = vmatprep.subr.bf16.mxu0 0
      %512 = vmatpush1.bf16.msra.mxu0 %v434
      %513 = vmatprep.subr.bf16.mxu0 0
      %514 = vmatpush1.bf16.msra.mxu0 %v435
      %515 = vmatprep.subr.bf16.mxu0 0
      %516 = vmatpush1.bf16.msra.mxu0 %v436
      %517 = vmatprep.mubr.bf16.mxu0 %v286
      %518 = vmatmul.mubr.bf16.gmra.mrb[0].mxu0 %v285
      %v519 = vpop.f32.mrb[0].mxu0
      %v520 = vadd.f32 0.0, %v519
      %v521 = vpop.f32.mrb[0].mxu0
      %v522 = vpop.f32.mrb[0].mxu0
      %v523 = vadd.f32 0.0, %v522
      %v524 = vpop.f32.mrb[0].mxu0
      %525 = vdwg.mxu0
      %526 = vmatprep.subr.bf16.mxu0 0
      %527 = vmatpush1.bf16.msra.mxu0 %v437
      %528 = vmatprep.subr.bf16.mxu0 0
      %529 = vmatpush1.bf16.msra.mxu0 %v438
      %530 = vmatprep.subr.bf16.mxu0 0
      %531 = vmatpush1.bf16.msra.mxu0 %v439
      %532 = vmatprep.subr.bf16.mxu0 0
      %533 = vmatpush1.bf16.msra.mxu0 %v440
      %534 = vmatprep.subr.bf16.mxu0 0
      %535 = vmatpush1.bf16.msra.mxu0 %v441
      %536 = vmatprep.subr.bf16.mxu0 0
      %537 = vmatpush1.bf16.msra.mxu0 %v442
      %538 = vmatprep.subr.bf16.mxu0 0
      %539 = vmatpush1.bf16.msra.mxu0 %v443
      %540 = vmatprep.subr.bf16.mxu0 0
      %541 = vmatpush1.bf16.msra.mxu0 %v444
      %542 = vmatprep.subr.bf16.mxu0 0
      %543 = vmatpush1.bf16.msra.mxu0 %v445
      %544 = vmatprep.subr.bf16.mxu0 0
      %545 = vmatpush1.bf16.msra.mxu0 %v446
      %546 = vmatprep.subr.bf16.mxu0 0
      %547 = vmatpush1.bf16.msra.mxu0 %v447
      %548 = vmatprep.subr.bf16.mxu0 0
      %549 = vmatpush1.bf16.msra.mxu0 %v448
      %550 = vmatprep.subr.bf16.mxu0 0
      %551 = vmatpush1.bf16.msra.mxu0 %v449
      %552 = vmatprep.subr.bf16.mxu0 0
      %553 = vmatpush1.bf16.msra.mxu0 %v450
      %554 = vmatprep.subr.bf16.mxu0 0
      %555 = vmatpush1.bf16.msra.mxu0 %v451
      %556 = vmatprep.subr.bf16.mxu0 0
      %557 = vmatpush1.bf16.msra.mxu0 %v452
      %558 = vmatprep.mubr.bf16.mxu0 %v288
      %559 = vmatmul.mubr.bf16.gmra.mrb[0].mxu0 %v287
      %v560 = vpop.f32.mrb[0].mxu0
      %v561 = vadd.f32 %v520, %v560
      %v562 = vpop.f32.mrb[0].mxu0
      %v563 = vpop.f32.mrb[0].mxu0
      %v564 = vadd.f32 %v523, %v563
      %v565 = vpop.f32.mrb[0].mxu0
      %566 = vdwg.mxu0
      %v567 = vld [vmem:[%s2] sm:$0x1]
      %v569 = vlaneseq
      %v570 = vshrl.u32 %v569, 7
      %v571 = vsub.s32 0, %v570
      %v572 = vrot.slane %v567, %v571
      %v574 = vmul.f32 %v561, %v572
      %v575 = vmul.f32 %v564, %v572
      %v576 = vld [vmem:[%s3] sm:$0x1]
      %v578 = vlaneseq
      %v579 = vshrl.u32 %v578, 7
      %v580 = vsub.s32 0, %v579
      %v581 = vrot.slane %v576, %v580
      %v583 = vadd.f32 %v574, %v581
      %v584 = vadd.f32 %v575, %v581
      %vm585 = vcmp.ge.f32.partialorder %v583, 0.0
      %vm586 = vcmp.ge.f32.partialorder %v584, 0.0
      %v587 = vmul.f32 %v583, 0.2
      %v588 = vmul.f32 %v584, 0.2
      %v589 = vsel %vm585, %v583, %v587
      %v590 = vsel %vm586, %v584, %v588
      %v591 = vpack.c.bf16 %v590, %v589
      %v593 = vunpack.c.l.b16 %v591
      %v594 = vunpack.c.h.b16 %v591
      %v595 = vpack.c.b16 %v593, %v593
      %v596 = vpack.c.b16 %v594, %v594
      %599 = vst [vmem:[%s202] sm:$0xf] %v595
      %600 = vst [vmem:[%s202 + $0x4] sm:$0xf] %v596
      %s601 = smul.u32 2, %s15
      %p602 = scmp.lt.s32.totalorder %s601, 3
      %s603 = scalar_select %p602, %s601, 3
      %s604 = smul.addr %s603, 4
      %s605 = scalar_lea.vmem %s4, %s604
      // Predicated region
      $region37: #{forward.7} parent=35 // pred_check
        %p606 = pneg %p122
      $region38: #{forward.7} parent=35 // pred_check_branch
        %608 = sbr.rel (%p606) target = $region40
      $region39: #{forward.7} parent=35 // pred_region
        %s609 = smul.u32 2, %s15
      $region40: #{forward.7} parent=35 // pred_fallthru
        _
    $region36: #{forward.7} parent=5 // pred_fallthru
      _
    %p610 = scmp.le.s32.totalorder 2, %s10
    // Predicated region
    $region41: #{forward.7} parent=5 // pred_check
      %p611 = pneg %p610
    $region42: #{forward.7} parent=5 // pred_check_branch
      %613 = sbr.rel (%p611) target = $region44
    $region43: #{forward.7} parent=5 // pred_region
      %s614 = ssub.s32 %s10, 2
      // Predicated region
      $region45: #{forward.7} parent=43 // pred_check
        %p615 = pneg %p128
      $region46: #{forward.7} parent=43 // pred_check_branch
        %617 = sbr.rel (%p615) target = $region48
      $region47: #{forward.7} parent=43 // pred_region
        %s618 = smul.u32 2, %s16
        %p619 = scmp.lt.s32.totalorder %s618, 3
        %s620 = scalar_select %p619, %s618, 3
        %s621 = smul.addr %s620, 4
        %s622 = scalar_lea.vmem %s4, %s621
      $region48: #{forward.7} parent=43 // pred_fallthru
        _
    $region44: #{forward.7} parent=5 // pred_fallthru
      _
  $region6: #{forward.7} parent=0 // loop_footer
    %s14 = sadd.s32 1, %s10
  $region7: #{forward.7} parent=0 // loop_footer_branch
    %9 = sbr.rel target = $region3
  $region8: #{forward.7} parent=0 // loop_exit
    _

// kernel: forward.9
$region0: #{forward.9}
  #allocation0 [shape = 'u32[]', space=smem, size = 0x4, offset = 0x4, fixed_abs, tag = 'smem constant byte address 0x4 - core index']
  #allocation1 [shape = 'u32[144,128]{1,0:T(1,128)}', space=vmem, size = 0x12000, scoped, tag = 'internal scratch']
  #allocation2 [shape = 'f32[1,1]{1,0:T(1,128)S(1)}', space=vmem, size = 0x200, scoped, tag = 'scoped memory for forward.9']
  #allocation3 [shape = 'f32[1,1]{1,0:T(1,128)S(1)}', space=vmem, size = 0x200, scoped, tag = 'scoped memory for forward.9']
  %s0 = inlined_call_operand.vmem [shape: bf16[16,1152], index: 0, kind: input, shape index: {}]
  %s1 = inlined_call_operand.vmem [shape: bf16[1,1152], index: 1, kind: input, shape index: {}]
  %s2 = inlined_call_operand.<no memory space> [shape: f32[1,1], index: 2, kind: input, shape index: {}]
  %s3 = inlined_call_operand.<no memory space> [shape: f32[1,1], index: 3, kind: input, shape index: {}]
  %s4 = inlined_call_operand.vmem [shape: f32[16,1], index: 4, kind: output, shape index: {}]
  %s5 = sld [smem:[#allocation0]]
  $region26: #{forward.9} parent=0
    _
  %s7 = ssub.s32 1, %s5
  %s8 = scalar_select 0, %s7, %s5
  %v9 = vstv %s2
  %10 = vst [vmem:[#allocation2] sm:$0x1] %v9
  %v11 = vstv %s3
  %12 = vst [vmem:[#allocation3] sm:$0x1] %v11
  // Predicated region
  $region2: #{forward.9} parent=0 // pred_check
    _
  $region3: #{forward.9} parent=0 // pred_check_branch
    %14 = sbr.rel (0) target = $region5
  $region4: #{forward.9} parent=0 // pred_region
    _
  $region5: #{forward.9} parent=0 // pred_fallthru
    _
  // Predicated region
  $region6: #{forward.9} parent=0 // pred_check
    _
  $region7: #{forward.9} parent=0 // pred_check_branch
    %16 = sbr.rel (0) target = $region9
  $region8: #{forward.9} parent=0 // pred_region
    _
  $region9: #{forward.9} parent=0 // pred_fallthru
    _
  // Predicated region
  $region10: #{forward.9} parent=0 // pred_check
    _
  $region11: #{forward.9} parent=0 // pred_check_branch
    %18 = sbr.rel (0) target = $region13
  $region12: #{forward.9} parent=0 // pred_region
    _
  $region13: #{forward.9} parent=0 // pred_fallthru
    _
  // Predicated region
  $region14: #{forward.9} parent=0 // pred_check
    _
  $region15: #{forward.9} parent=0 // pred_check_branch
    %20 = sbr.rel (0) target = $region17
  $region16: #{forward.9} parent=0 // pred_region
    _
  $region17: #{forward.9} parent=0 // pred_fallthru
    _
  %v21 = vld [vmem:[%s0] sm:$0xff]
  %v22 = vld [vmem:[%s0 + $0x8] sm:$0xff]
  %v23 = vld [vmem:[%s0 + $0x10] sm:$0xff]
  %v24 = vld [vmem:[%s0 + $0x18] sm:$0xff]
  %v25 = vld [vmem:[%s0 + $0x20] sm:$0xf]
  %v26 = vld [vmem:[%s0 + $0x24] sm:$0xff]
  %v27 = vld [vmem:[%s0 + $0x2c] sm:$0xff]
  %v28 = vld [vmem:[%s0 + $0x34] sm:$0xff]
  %v29 = vld [vmem:[%s0 + $0x3c] sm:$0xff]
  %v30 = vld [vmem:[%s0 + $0x44] sm:$0xf]
  %v31 = vunpack.c.l.bf16 %v21
  %v32 = vunpack.c.h.bf16 %v21
  %v33 = vunpack.c.l.bf16 %v22
  %v34 = vunpack.c.h.bf16 %v22
  %v35 = vunpack.c.l.bf16 %v23
  %v36 = vunpack.c.h.bf16 %v23
  %v37 = vunpack.c.l.bf16 %v24
  %v38 = vunpack.c.h.bf16 %v24
  %v39 = vunpack.c.l.bf16 %v25
  %v40 = vunpack.c.l.bf16 %v26
  %v41 = vunpack.c.h.bf16 %v26
  %v42 = vunpack.c.l.bf16 %v27
  %v43 = vunpack.c.h.bf16 %v27
  %v44 = vunpack.c.l.bf16 %v28
  %v45 = vunpack.c.h.bf16 %v28
  %v46 = vunpack.c.l.bf16 %v29
  %v47 = vunpack.c.h.bf16 %v29
  %v48 = vunpack.c.l.bf16 %v30
  %v49 = vld [vmem:[%s1] sm:$0xff]
  %v50 = vld [vmem:[%s1 + $0x8] sm:$0x1]
  %v51 = vunpack.c.l.bf16 %v49
  %v52 = vunpack.c.h.bf16 %v49
  %v53 = vunpack.c.l.bf16 %v50
  %v57 = vlaneseq
  %v58 = vshrl.u32 %v57, 7
  %v59 = vsub.s32 0, %v58
  %v60 = vrot.slane %v51, %v59
  %v61 = vlaneseq
  %v62 = vshrl.u32 %v61, 7
  %v63 = vsub.s32 2, %v62
  %v64 = vrot.slane %v51, %v63
  %v65 = vlaneseq
  %v66 = vshrl.u32 %v65, 7
  %v67 = vsub.s32 4, %v66
  %v68 = vrot.slane %v51, %v67
  %v69 = vlaneseq
  %v70 = vshrl.u32 %v69, 7
  %v71 = vsub.s32 6, %v70
  %v72 = vrot.slane %v51, %v71
  %v73 = vlaneseq
  %v74 = vshrl.u32 %v73, 7
  %v75 = vsub.s32 0, %v74
  %v76 = vrot.slane %v52, %v75
  %v77 = vlaneseq
  %v78 = vshrl.u32 %v77, 7
  %v79 = vsub.s32 2, %v78
  %v80 = vrot.slane %v52, %v79
  %v81 = vlaneseq
  %v82 = vshrl.u32 %v81, 7
  %v83 = vsub.s32 4, %v82
  %v84 = vrot.slane %v52, %v83
  %v85 = vlaneseq
  %v86 = vshrl.u32 %v85, 7
  %v87 = vsub.s32 6, %v86
  %v88 = vrot.slane %v52, %v87
  %v89 = vlaneseq
  %v90 = vshrl.u32 %v89, 7
  %v91 = vsub.s32 0, %v90
  %v92 = vrot.slane %v53, %v91
  %v102 = vlaneseq
  %v103 = vshrl.u32 %v102, 7
  %v104 = vsub.s32 0, %v103
  %v105 = vrot.slane %v60, %v104
  %v106 = vlaneseq
  %v107 = vshrl.u32 %v106, 7
  %v108 = vsub.s32 0, %v107
  %v109 = vrot.slane %v64, %v108
  %v110 = vlaneseq
  %v111 = vshrl.u32 %v110, 7
  %v112 = vsub.s32 0, %v111
  %v113 = vrot.slane %v68, %v112
  %v114 = vlaneseq
  %v115 = vshrl.u32 %v114, 7
  %v116 = vsub.s32 0, %v115
  %v117 = vrot.slane %v72, %v116
  %v118 = vlaneseq
  %v119 = vshrl.u32 %v118, 7
  %v120 = vsub.s32 0, %v119
  %v121 = vrot.slane %v76, %v120
  %v122 = vlaneseq
  %v123 = vshrl.u32 %v122, 7
  %v124 = vsub.s32 0, %v123
  %v125 = vrot.slane %v80, %v124
  %v126 = vlaneseq
  %v127 = vshrl.u32 %v126, 7
  %v128 = vsub.s32 0, %v127
  %v129 = vrot.slane %v84, %v128
  %v130 = vlaneseq
  %v131 = vshrl.u32 %v130, 7
  %v132 = vsub.s32 0, %v131
  %v133 = vrot.slane %v88, %v132
  %v134 = vlaneseq
  %v135 = vshrl.u32 %v134, 7
  %v136 = vsub.s32 0, %v135
  %v137 = vrot.slane %v92, %v136
  %v138 = vmul.f32 %v31, %v105
  %v139 = vmul.f32 %v32, %v109
  %v140 = vmul.f32 %v33, %v113
  %v141 = vmul.f32 %v34, %v117
  %v142 = vmul.f32 %v35, %v121
  %v143 = vmul.f32 %v36, %v125
  %v144 = vmul.f32 %v37, %v129
  %v145 = vmul.f32 %v38, %v133
  %v146 = vmul.f32 %v39, %v137
  %v147 = vmul.f32 %v40, %v105
  %v148 = vmul.f32 %v41, %v109
  %v149 = vmul.f32 %v42, %v113
  %v150 = vmul.f32 %v43, %v117
  %v151 = vmul.f32 %v44, %v121
  %v152 = vmul.f32 %v45, %v125
  %v153 = vmul.f32 %v46, %v129
  %v154 = vmul.f32 %v47, %v133
  %v155 = vmul.f32 %v48, %v137
  %v156 = vadd.f32 %v138, %v139
  %v157 = vadd.f32 %v156, %v140
  %v158 = vadd.f32 %v157, %v141
  %v159 = vadd.f32 %v158, %v142
  %v160 = vadd.f32 %v159, %v143
  %v161 = vadd.f32 %v160, %v144
  %v162 = vadd.f32 %v161, %v145
  %v163 = vadd.f32 %v162, %v146
  %164 = vadd.xlane.f32.xlu0 %v163
  %v165 = vpop.xlane.xlu0 %164
  %v166 = vadd.f32 %v147, %v148
  %v167 = vadd.f32 %v166, %v149
  %v168 = vadd.f32 %v167, %v150
  %v169 = vadd.f32 %v168, %v151
  %v170 = vadd.f32 %v169, %v152
  %v171 = vadd.f32 %v170, %v153
  %v172 = vadd.f32 %v171, %v154
  %v173 = vadd.f32 %v172, %v155
  %174 = vadd.xlane.f32.xlu0 %v173
  %v175 = vpop.xlane.xlu0 %174
  %v176 = vld [vmem:[#allocation2] sm:$0x1]
  %v178 = vlaneseq
  %v179 = vshrl.u32 %v178, 7
  %v180 = vsub.s32 0, %v179
  %v181 = vrot.slane %v176, %v180
  %v183 = vmul.f32 %v165, %v181
  %v184 = vmul.f32 %v175, %v181
  %v185 = vld [vmem:[#allocation3] sm:$0x1]
  %v187 = vlaneseq
  %v188 = vshrl.u32 %v187, 7
  %v189 = vsub.s32 0, %v188
  %v190 = vrot.slane %v185, %v189
  %v192 = vadd.f32 %v183, %v190
  %v193 = vadd.f32 %v184, %v190
  %v194 = vxor.u32 %v192, 2147483648
  %v195 = vxor.u32 %v193, 2147483648
  %v196 = vmul.f32 %v194, 1.442695
  %v197 = vpow.pop %v196
  %v198 = vmul.f32 %v195, 1.442695
  %v199 = vpow.pop %v198
  %v200 = vadd.f32 %v197, 1.0
  %v201 = vadd.f32 %v199, 1.0
  %v202 = vrcp.pop %v200
  %v203 = vmul.f32 1.0, %v202
  %v204 = vrcp.pop %v201
  %v205 = vmul.f32 1.0, %v204
  %vm206 = vcmask 7168
  %207 = vst.msk [vmem:[%s4] sm:$0xff] %vm206, %v203
  %208 = vst.msk [vmem:[%s4 + $0x8] sm:$0xff] %vm206, %v205
  // Predicated region
  $region18: #{forward.9} parent=0 // pred_check
    _
  $region19: #{forward.9} parent=0 // pred_check_branch
    %210 = sbr.rel (0) target = $region21
  $region20: #{forward.9} parent=0 // pred_region
    _
  $region21: #{forward.9} parent=0 // pred_fallthru
    _
  // Predicated region
  $region22: #{forward.9} parent=0 // pred_check
    _
  $region23: #{forward.9} parent=0 // pred_check_branch
    %212 = sbr.rel (0) target = $region25
  $region24: #{forward.9} parent=0 // pred_region
    _
  $region25: #{forward.9} parent=0 // pred_fallthru
    _

// kernel: forward.8
$region0: #{forward.8}
  #allocation0 [shape = 'u32[]', space=smem, size = 0x4, offset = 0x4, fixed_abs, tag = 'smem constant byte address 0x4 - core index']
  #allocation1 [shape = 'u32[144,128]{1,0:T(1,128)}', space=vmem, size = 0x12000, scoped, tag = 'internal scratch']
  %s0 = inlined_call_operand.vmem [shape: bf16[16,1024], index: 0, kind: input, shape index: {}]
  %s1 = inlined_call_operand.vmem [shape: bf16[1024,128], index: 1, kind: input, shape index: {}]
  %s2 = inlined_call_operand.vmem [shape: f32[1,128], index: 2, kind: input, shape index: {}]
  %s3 = inlined_call_operand.vmem [shape: f32[1,128], index: 3, kind: input, shape index: {}]
  %s4 = inlined_call_operand.vmem [shape: bf16[16,128], index: 4, kind: output, shape index: {}]
  %s5 = sld [smem:[#allocation0]]
  $region26: #{forward.8} parent=0
    _
  %s7 = ssub.s32 1, %s5
  %s8 = scalar_select 0, %s7, %s5
  // Predicated region
  $region2: #{forward.8} parent=0 // pred_check
    _
  $region3: #{forward.8} parent=0 // pred_check_branch
    %10 = sbr.rel (0) target = $region5
  $region4: #{forward.8} parent=0 // pred_region
    _
  $region5: #{forward.8} parent=0 // pred_fallthru
    _
  // Predicated region
  $region6: #{forward.8} parent=0 // pred_check
    _
  $region7: #{forward.8} parent=0 // pred_check_branch
    %12 = sbr.rel (0) target = $region9
  $region8: #{forward.8} parent=0 // pred_region
    _
  $region9: #{forward.8} parent=0 // pred_fallthru
    _
  // Predicated region
  $region10: #{forward.8} parent=0 // pred_check
    _
  $region11: #{forward.8} parent=0 // pred_check_branch
    %14 = sbr.rel (0) target = $region13
  $region12: #{forward.8} parent=0 // pred_region
    _
  $region13: #{forward.8} parent=0 // pred_fallthru
    _
  // Predicated region
  $region14: #{forward.8} parent=0 // pred_check
    _
  $region15: #{forward.8} parent=0 // pred_check_branch
    %16 = sbr.rel (0) target = $region17
  $region16: #{forward.8} parent=0 // pred_region
    _
  $region17: #{forward.8} parent=0 // pred_fallthru
    _
  %v18 = vld [vmem:[%s0] sm:$0xff]
  %v19 = vld [vmem:[%s0 + $0x8] sm:$0xff]
  %v20 = vld [vmem:[%s0 + $0x10] sm:$0xff]
  %v21 = vld [vmem:[%s0 + $0x18] sm:$0xff]
  %v22 = vld [vmem:[%s0 + $0x20] sm:$0xff]
  %v23 = vld [vmem:[%s0 + $0x28] sm:$0xff]
  %v24 = vld [vmem:[%s0 + $0x30] sm:$0xff]
  %v25 = vld [vmem:[%s0 + $0x38] sm:$0xff]
  %v26 = vld [vmem:[%s1] sm:$0xf]
  %v27 = vld [vmem:[%s1 + $0x4] sm:$0xf]
  %v28 = vld [vmem:[%s1 + $0x8] sm:$0xf]
  %v29 = vld [vmem:[%s1 + $0xc] sm:$0xf]
  %v30 = vld [vmem:[%s1 + $0x10] sm:$0xf]
  %v31 = vld [vmem:[%s1 + $0x14] sm:$0xf]
  %v32 = vld [vmem:[%s1 + $0x18] sm:$0xf]
  %v33 = vld [vmem:[%s1 + $0x1c] sm:$0xf]
  %v34 = vld [vmem:[%s1 + $0x20] sm:$0xf]
  %v35 = vld [vmem:[%s1 + $0x24] sm:$0xf]
  %v36 = vld [vmem:[%s1 + $0x28] sm:$0xf]
  %v37 = vld [vmem:[%s1 + $0x2c] sm:$0xf]
  %v38 = vld [vmem:[%s1 + $0x30] sm:$0xf]
  %v39 = vld [vmem:[%s1 + $0x34] sm:$0xf]
  %v40 = vld [vmem:[%s1 + $0x38] sm:$0xf]
  %v41 = vld [vmem:[%s1 + $0x3c] sm:$0xf]
  %v42 = vld [vmem:[%s1 + $0x40] sm:$0xf]
  %v43 = vld [vmem:[%s1 + $0x44] sm:$0xf]
  %v44 = vld [vmem:[%s1 + $0x48] sm:$0xf]
  %v45 = vld [vmem:[%s1 + $0x4c] sm:$0xf]
  %v46 = vld [vmem:[%s1 + $0x50] sm:$0xf]
  %v47 = vld [vmem:[%s1 + $0x54] sm:$0xf]
  %v48 = vld [vmem:[%s1 + $0x58] sm:$0xf]
  %v49 = vld [vmem:[%s1 + $0x5c] sm:$0xf]
  %v50 = vld [vmem:[%s1 + $0x60] sm:$0xf]
  %v51 = vld [vmem:[%s1 + $0x64] sm:$0xf]
  %v52 = vld [vmem:[%s1 + $0x68] sm:$0xf]
  %v53 = vld [vmem:[%s1 + $0x6c] sm:$0xf]
  %v54 = vld [vmem:[%s1 + $0x70] sm:$0xf]
  %v55 = vld [vmem:[%s1 + $0x74] sm:$0xf]
  %v56 = vld [vmem:[%s1 + $0x78] sm:$0xf]
  %v57 = vld [vmem:[%s1 + $0x7c] sm:$0xf]
  %v58 = vld [vmem:[%s1 + $0x80] sm:$0xf]
  %v59 = vld [vmem:[%s1 + $0x84] sm:$0xf]
  %v60 = vld [vmem:[%s1 + $0x88] sm:$0xf]
  %v61 = vld [vmem:[%s1 + $0x8c] sm:$0xf]
  %v62 = vld [vmem:[%s1 + $0x90] sm:$0xf]
  %v63 = vld [vmem:[%s1 + $0x94] sm:$0xf]
  %v64 = vld [vmem:[%s1 + $0x98] sm:$0xf]
  %v65 = vld [vmem:[%s1 + $0x9c] sm:$0xf]
  %v66 = vld [vmem:[%s1 + $0xa0] sm:$0xf]
  %v67 = vld [vmem:[%s1 + $0xa4] sm:$0xf]
  %v68 = vld [vmem:[%s1 + $0xa8] sm:$0xf]
  %v69 = vld [vmem:[%s1 + $0xac] sm:$0xf]
  %v70 = vld [vmem:[%s1 + $0xb0] sm:$0xf]
  %v71 = vld [vmem:[%s1 + $0xb4] sm:$0xf]
  %v72 = vld [vmem:[%s1 + $0xb8] sm:$0xf]
  %v73 = vld [vmem:[%s1 + $0xbc] sm:$0xf]
  %v74 = vld [vmem:[%s1 + $0xc0] sm:$0xf]
  %v75 = vld [vmem:[%s1 + $0xc4] sm:$0xf]
  %v76 = vld [vmem:[%s1 + $0xc8] sm:$0xf]
  %v77 = vld [vmem:[%s1 + $0xcc] sm:$0xf]
  %v78 = vld [vmem:[%s1 + $0xd0] sm:$0xf]
  %v79 = vld [vmem:[%s1 + $0xd4] sm:$0xf]
  %v80 = vld [vmem:[%s1 + $0xd8] sm:$0xf]
  %v81 = vld [vmem:[%s1 + $0xdc] sm:$0xf]
  %v82 = vld [vmem:[%s1 + $0xe0] sm:$0xf]
  %v83 = vld [vmem:[%s1 + $0xe4] sm:$0xf]
  %v84 = vld [vmem:[%s1 + $0xe8] sm:$0xf]
  %v85 = vld [vmem:[%s1 + $0xec] sm:$0xf]
  %v86 = vld [vmem:[%s1 + $0xf0] sm:$0xf]
  %v87 = vld [vmem:[%s1 + $0xf4] sm:$0xf]
  %v88 = vld [vmem:[%s1 + $0xf8] sm:$0xf]
  %v89 = vld [vmem:[%s1 + $0xfc] sm:$0xf]
  %v90 = vld [vmem:[%s1 + $0x100] sm:$0xf]
  %v91 = vld [vmem:[%s1 + $0x104] sm:$0xf]
  %v92 = vld [vmem:[%s1 + $0x108] sm:$0xf]
  %v93 = vld [vmem:[%s1 + $0x10c] sm:$0xf]
  %v94 = vld [vmem:[%s1 + $0x110] sm:$0xf]
  %v95 = vld [vmem:[%s1 + $0x114] sm:$0xf]
  %v96 = vld [vmem:[%s1 + $0x118] sm:$0xf]
  %v97 = vld [vmem:[%s1 + $0x11c] sm:$0xf]
  %v98 = vld [vmem:[%s1 + $0x120] sm:$0xf]
  %v99 = vld [vmem:[%s1 + $0x124] sm:$0xf]
  %v100 = vld [vmem:[%s1 + $0x128] sm:$0xf]
  %v101 = vld [vmem:[%s1 + $0x12c] sm:$0xf]
  %v102 = vld [vmem:[%s1 + $0x130] sm:$0xf]
  %v103 = vld [vmem:[%s1 + $0x134] sm:$0xf]
  %v104 = vld [vmem:[%s1 + $0x138] sm:$0xf]
  %v105 = vld [vmem:[%s1 + $0x13c] sm:$0xf]
  %v106 = vld [vmem:[%s1 + $0x140] sm:$0xf]
  %v107 = vld [vmem:[%s1 + $0x144] sm:$0xf]
  %v108 = vld [vmem:[%s1 + $0x148] sm:$0xf]
  %v109 = vld [vmem:[%s1 + $0x14c] sm:$0xf]
  %v110 = vld [vmem:[%s1 + $0x150] sm:$0xf]
  %v111 = vld [vmem:[%s1 + $0x154] sm:$0xf]
  %v112 = vld [vmem:[%s1 + $0x158] sm:$0xf]
  %v113 = vld [vmem:[%s1 + $0x15c] sm:$0xf]
  %v114 = vld [vmem:[%s1 + $0x160] sm:$0xf]
  %v115 = vld [vmem:[%s1 + $0x164] sm:$0xf]
  %v116 = vld [vmem:[%s1 + $0x168] sm:$0xf]
  %v117 = vld [vmem:[%s1 + $0x16c] sm:$0xf]
  %v118 = vld [vmem:[%s1 + $0x170] sm:$0xf]
  %v119 = vld [vmem:[%s1 + $0x174] sm:$0xf]
  %v120 = vld [vmem:[%s1 + $0x178] sm:$0xf]
  %v121 = vld [vmem:[%s1 + $0x17c] sm:$0xf]
  %v122 = vld [vmem:[%s1 + $0x180] sm:$0xf]
  %v123 = vld [vmem:[%s1 + $0x184] sm:$0xf]
  %v124 = vld [vmem:[%s1 + $0x188] sm:$0xf]
  %v125 = vld [vmem:[%s1 + $0x18c] sm:$0xf]
  %v126 = vld [vmem:[%s1 + $0x190] sm:$0xf]
  %v127 = vld [vmem:[%s1 + $0x194] sm:$0xf]
  %v128 = vld [vmem:[%s1 + $0x198] sm:$0xf]
  %v129 = vld [vmem:[%s1 + $0x19c] sm:$0xf]
  %v130 = vld [vmem:[%s1 + $0x1a0] sm:$0xf]
  %v131 = vld [vmem:[%s1 + $0x1a4] sm:$0xf]
  %v132 = vld [vmem:[%s1 + $0x1a8] sm:$0xf]
  %v133 = vld [vmem:[%s1 + $0x1ac] sm:$0xf]
  %v134 = vld [vmem:[%s1 + $0x1b0] sm:$0xf]
  %v135 = vld [vmem:[%s1 + $0x1b4] sm:$0xf]
  %v136 = vld [vmem:[%s1 + $0x1b8] sm:$0xf]
  %v137 = vld [vmem:[%s1 + $0x1bc] sm:$0xf]
  %v138 = vld [vmem:[%s1 + $0x1c0] sm:$0xf]
  %v139 = vld [vmem:[%s1 + $0x1c4] sm:$0xf]
  %v140 = vld [vmem:[%s1 + $0x1c8] sm:$0xf]
  %v141 = vld [vmem:[%s1 + $0x1cc] sm:$0xf]
  %v142 = vld [vmem:[%s1 + $0x1d0] sm:$0xf]
  %v143 = vld [vmem:[%s1 + $0x1d4] sm:$0xf]
  %v144 = vld [vmem:[%s1 + $0x1d8] sm:$0xf]
  %v145 = vld [vmem:[%s1 + $0x1dc] sm:$0xf]
  %v146 = vld [vmem:[%s1 + $0x1e0] sm:$0xf]
  %v147 = vld [vmem:[%s1 + $0x1e4] sm:$0xf]
  %v148 = vld [vmem:[%s1 + $0x1e8] sm:$0xf]
  %v149 = vld [vmem:[%s1 + $0x1ec] sm:$0xf]
  %v150 = vld [vmem:[%s1 + $0x1f0] sm:$0xf]
  %v151 = vld [vmem:[%s1 + $0x1f4] sm:$0xf]
  %v152 = vld [vmem:[%s1 + $0x1f8] sm:$0xf]
  %v153 = vld [vmem:[%s1 + $0x1fc] sm:$0xf]
  %v162 = vunpack.c.l.b16 %v18
  %v163 = vunpack.c.h.b16 %v18
  %v164 = vunpack.c.l.b16 %v19
  %v165 = vunpack.c.h.b16 %v19
  %v166 = vunpack.c.l.b16 %v20
  %v167 = vunpack.c.h.b16 %v20
  %v168 = vunpack.c.l.b16 %v21
  %v169 = vunpack.c.h.b16 %v21
  %v170 = vunpack.c.l.b16 %v22
  %v171 = vunpack.c.h.b16 %v22
  %v172 = vunpack.c.l.b16 %v23
  %v173 = vunpack.c.h.b16 %v23
  %v174 = vunpack.c.l.b16 %v24
  %v175 = vunpack.c.h.b16 %v24
  %v176 = vunpack.c.l.b16 %v25
  %v177 = vunpack.c.h.b16 %v25
  %v178 = vpack.c.b16 %v170, %v162
  %v179 = vpack.c.b16 %v171, %v163
  %v180 = vpack.c.b16 %v172, %v164
  %v181 = vpack.c.b16 %v173, %v165
  %v182 = vpack.c.b16 %v174, %v166
  %v183 = vpack.c.b16 %v175, %v167
  %v184 = vpack.c.b16 %v176, %v168
  %v185 = vpack.c.b16 %v177, %v169
  %v322 = vunpack.c.l.b16 %v26
  %v323 = vunpack.c.l.b16 %v27
  %v324 = vunpack.c.l.b16 %v28
  %v325 = vunpack.c.l.b16 %v29
  %v326 = vunpack.c.l.b16 %v30
  %v327 = vunpack.c.l.b16 %v31
  %v328 = vunpack.c.l.b16 %v32
  %v329 = vunpack.c.l.b16 %v33
  %v330 = vunpack.c.l.b16 %v34
  %v331 = vunpack.c.l.b16 %v35
  %v332 = vunpack.c.l.b16 %v36
  %v333 = vunpack.c.l.b16 %v37
  %v334 = vunpack.c.l.b16 %v38
  %v335 = vunpack.c.l.b16 %v39
  %v336 = vunpack.c.l.b16 %v40
  %v337 = vunpack.c.l.b16 %v41
  %v338 = vunpack.c.l.b16 %v42
  %v339 = vunpack.c.l.b16 %v43
  %v340 = vunpack.c.l.b16 %v44
  %v341 = vunpack.c.l.b16 %v45
  %v342 = vunpack.c.l.b16 %v46
  %v343 = vunpack.c.l.b16 %v47
  %v344 = vunpack.c.l.b16 %v48
  %v345 = vunpack.c.l.b16 %v49
  %v346 = vunpack.c.l.b16 %v50
  %v347 = vunpack.c.l.b16 %v51
  %v348 = vunpack.c.l.b16 %v52
  %v349 = vunpack.c.l.b16 %v53
  %v350 = vunpack.c.l.b16 %v54
  %v351 = vunpack.c.l.b16 %v55
  %v352 = vunpack.c.l.b16 %v56
  %v353 = vunpack.c.l.b16 %v57
  %v354 = vunpack.c.l.b16 %v58
  %v355 = vunpack.c.l.b16 %v59
  %v356 = vunpack.c.l.b16 %v60
  %v357 = vunpack.c.l.b16 %v61
  %v358 = vunpack.c.l.b16 %v62
  %v359 = vunpack.c.l.b16 %v63
  %v360 = vunpack.c.l.b16 %v64
  %v361 = vunpack.c.l.b16 %v65
  %v362 = vunpack.c.l.b16 %v66
  %v363 = vunpack.c.l.b16 %v67
  %v364 = vunpack.c.l.b16 %v68
  %v365 = vunpack.c.l.b16 %v69
  %v366 = vunpack.c.l.b16 %v70
  %v367 = vunpack.c.l.b16 %v71
  %v368 = vunpack.c.l.b16 %v72
  %v369 = vunpack.c.l.b16 %v73
  %v370 = vunpack.c.l.b16 %v74
  %v371 = vunpack.c.l.b16 %v75
  %v372 = vunpack.c.l.b16 %v76
  %v373 = vunpack.c.l.b16 %v77
  %v374 = vunpack.c.l.b16 %v78
  %v375 = vunpack.c.l.b16 %v79
  %v376 = vunpack.c.l.b16 %v80
  %v377 = vunpack.c.l.b16 %v81
  %v378 = vunpack.c.l.b16 %v82
  %v379 = vunpack.c.l.b16 %v83
  %v380 = vunpack.c.l.b16 %v84
  %v381 = vunpack.c.l.b16 %v85
  %v382 = vunpack.c.l.b16 %v86
  %v383 = vunpack.c.l.b16 %v87
  %v384 = vunpack.c.l.b16 %v88
  %v385 = vunpack.c.l.b16 %v89
  %v386 = vunpack.c.l.b16 %v90
  %v387 = vunpack.c.l.b16 %v91
  %v388 = vunpack.c.l.b16 %v92
  %v389 = vunpack.c.l.b16 %v93
  %v390 = vunpack.c.l.b16 %v94
  %v391 = vunpack.c.l.b16 %v95
  %v392 = vunpack.c.l.b16 %v96
  %v393 = vunpack.c.l.b16 %v97
  %v394 = vunpack.c.l.b16 %v98
  %v395 = vunpack.c.l.b16 %v99
  %v396 = vunpack.c.l.b16 %v100
  %v397 = vunpack.c.l.b16 %v101
  %v398 = vunpack.c.l.b16 %v102
  %v399 = vunpack.c.l.b16 %v103
  %v400 = vunpack.c.l.b16 %v104
  %v401 = vunpack.c.l.b16 %v105
  %v402 = vunpack.c.l.b16 %v106
  %v403 = vunpack.c.l.b16 %v107
  %v404 = vunpack.c.l.b16 %v108
  %v405 = vunpack.c.l.b16 %v109
  %v406 = vunpack.c.l.b16 %v110
  %v407 = vunpack.c.l.b16 %v111
  %v408 = vunpack.c.l.b16 %v112
  %v409 = vunpack.c.l.b16 %v113
  %v410 = vunpack.c.l.b16 %v114
  %v411 = vunpack.c.l.b16 %v115
  %v412 = vunpack.c.l.b16 %v116
  %v413 = vunpack.c.l.b16 %v117
  %v414 = vunpack.c.l.b16 %v118
  %v415 = vunpack.c.l.b16 %v119
  %v416 = vunpack.c.l.b16 %v120
  %v417 = vunpack.c.l.b16 %v121
  %v418 = vunpack.c.l.b16 %v122
  %v419 = vunpack.c.l.b16 %v123
  %v420 = vunpack.c.l.b16 %v124
  %v421 = vunpack.c.l.b16 %v125
  %v422 = vunpack.c.l.b16 %v126
  %v423 = vunpack.c.l.b16 %v127
  %v424 = vunpack.c.l.b16 %v128
  %v425 = vunpack.c.l.b16 %v129
  %v426 = vunpack.c.l.b16 %v130
  %v427 = vunpack.c.l.b16 %v131
  %v428 = vunpack.c.l.b16 %v132
  %v429 = vunpack.c.l.b16 %v133
  %v430 = vunpack.c.l.b16 %v134
  %v431 = vunpack.c.l.b16 %v135
  %v432 = vunpack.c.l.b16 %v136
  %v433 = vunpack.c.l.b16 %v137
  %v434 = vunpack.c.l.b16 %v138
  %v435 = vunpack.c.l.b16 %v139
  %v436 = vunpack.c.l.b16 %v140
  %v437 = vunpack.c.l.b16 %v141
  %v438 = vunpack.c.l.b16 %v142
  %v439 = vunpack.c.l.b16 %v143
  %v440 = vunpack.c.l.b16 %v144
  %v441 = vunpack.c.l.b16 %v145
  %v442 = vunpack.c.l.b16 %v146
  %v443 = vunpack.c.l.b16 %v147
  %v444 = vunpack.c.l.b16 %v148
  %v445 = vunpack.c.l.b16 %v149
  %v446 = vunpack.c.l.b16 %v150
  %v447 = vunpack.c.l.b16 %v151
  %v448 = vunpack.c.l.b16 %v152
  %v449 = vunpack.c.l.b16 %v153
  %v450 = vpack.c.b16 %v323, %v322
  %v451 = vpack.c.b16 %v325, %v324
  %v452 = vpack.c.b16 %v327, %v326
  %v453 = vpack.c.b16 %v329, %v328
  %v454 = vpack.c.b16 %v331, %v330
  %v455 = vpack.c.b16 %v333, %v332
  %v456 = vpack.c.b16 %v335, %v334
  %v457 = vpack.c.b16 %v337, %v336
  %v458 = vpack.c.b16 %v339, %v338
  %v459 = vpack.c.b16 %v341, %v340
  %v460 = vpack.c.b16 %v343, %v342
  %v461 = vpack.c.b16 %v345, %v344
  %v462 = vpack.c.b16 %v347, %v346
  %v463 = vpack.c.b16 %v349, %v348
  %v464 = vpack.c.b16 %v351, %v350
  %v465 = vpack.c.b16 %v353, %v352
  %v466 = vpack.c.b16 %v355, %v354
  %v467 = vpack.c.b16 %v357, %v356
  %v468 = vpack.c.b16 %v359, %v358
  %v469 = vpack.c.b16 %v361, %v360
  %v470 = vpack.c.b16 %v363, %v362
  %v471 = vpack.c.b16 %v365, %v364
  %v472 = vpack.c.b16 %v367, %v366
  %v473 = vpack.c.b16 %v369, %v368
  %v474 = vpack.c.b16 %v371, %v370
  %v475 = vpack.c.b16 %v373, %v372
  %v476 = vpack.c.b16 %v375, %v374
  %v477 = vpack.c.b16 %v377, %v376
  %v478 = vpack.c.b16 %v379, %v378
  %v479 = vpack.c.b16 %v381, %v380
  %v480 = vpack.c.b16 %v383, %v382
  %v481 = vpack.c.b16 %v385, %v384
  %v482 = vpack.c.b16 %v387, %v386
  %v483 = vpack.c.b16 %v389, %v388
  %v484 = vpack.c.b16 %v391, %v390
  %v485 = vpack.c.b16 %v393, %v392
  %v486 = vpack.c.b16 %v395, %v394
  %v487 = vpack.c.b16 %v397, %v396
  %v488 = vpack.c.b16 %v399, %v398
  %v489 = vpack.c.b16 %v401, %v400
  %v490 = vpack.c.b16 %v403, %v402
  %v491 = vpack.c.b16 %v405, %v404
  %v492 = vpack.c.b16 %v407, %v406
  %v493 = vpack.c.b16 %v409, %v408
  %v494 = vpack.c.b16 %v411, %v410
  %v495 = vpack.c.b16 %v413, %v412
  %v496 = vpack.c.b16 %v415, %v414
  %v497 = vpack.c.b16 %v417, %v416
  %v498 = vpack.c.b16 %v419, %v418
  %v499 = vpack.c.b16 %v421, %v420
  %v500 = vpack.c.b16 %v423, %v422
  %v501 = vpack.c.b16 %v425, %v424
  %v502 = vpack.c.b16 %v427, %v426
  %v503 = vpack.c.b16 %v429, %v428
  %v504 = vpack.c.b16 %v431, %v430
  %v505 = vpack.c.b16 %v433, %v432
  %v506 = vpack.c.b16 %v435, %v434
  %v507 = vpack.c.b16 %v437, %v436
  %v508 = vpack.c.b16 %v439, %v438
  %v509 = vpack.c.b16 %v441, %v440
  %v510 = vpack.c.b16 %v443, %v442
  %v511 = vpack.c.b16 %v445, %v444
  %v512 = vpack.c.b16 %v447, %v446
  %v513 = vpack.c.b16 %v449, %v448
  %578 = vmatprep.subr.bf16.mxu0 0
  %579 = vmatpush1.bf16.msra.mxu0 %v450
  %580 = vmatprep.subr.bf16.mxu0 0
  %581 = vmatpush1.bf16.msra.mxu0 %v451
  %582 = vmatprep.subr.bf16.mxu0 0
  %583 = vmatpush1.bf16.msra.mxu0 %v452
  %584 = vmatprep.subr.bf16.mxu0 0
  %585 = vmatpush1.bf16.msra.mxu0 %v453
  %586 = vmatprep.subr.bf16.mxu0 0
  %587 = vmatpush1.bf16.msra.mxu0 %v454
  %588 = vmatprep.subr.bf16.mxu0 0
  %589 = vmatpush1.bf16.msra.mxu0 %v455
  %590 = vmatprep.subr.bf16.mxu0 0
  %591 = vmatpush1.bf16.msra.mxu0 %v456
  %592 = vmatprep.subr.bf16.mxu0 0
  %593 = vmatpush1.bf16.msra.mxu0 %v457
  %594 = vmatprep.subr.bf16.mxu0 0
  %595 = vmatpush1.bf16.msra.mxu0 %v458
  %596 = vmatprep.subr.bf16.mxu0 0
  %597 = vmatpush1.bf16.msra.mxu0 %v459
  %598 = vmatprep.subr.bf16.mxu0 0
  %599 = vmatpush1.bf16.msra.mxu0 %v460
  %600 = vmatprep.subr.bf16.mxu0 0
  %601 = vmatpush1.bf16.msra.mxu0 %v461
  %602 = vmatprep.subr.bf16.mxu0 0
  %603 = vmatpush1.bf16.msra.mxu0 %v462
  %604 = vmatprep.subr.bf16.mxu0 0
  %605 = vmatpush1.bf16.msra.mxu0 %v463
  %606 = vmatprep.subr.bf16.mxu0 0
  %607 = vmatpush1.bf16.msra.mxu0 %v464
  %608 = vmatprep.subr.bf16.mxu0 0
  %609 = vmatpush1.bf16.msra.mxu0 %v465
  %610 = vmatprep.mubr.bf16.mxu0 %v179
  %611 = vmatmul.mubr.bf16.gmra.mrb[0].mxu0 %v178
  %v612 = vpop.f32.mrb[0].mxu0
  %v613 = vadd.f32 0.0, %v612
  %v614 = vpop.f32.mrb[0].mxu0
  %v615 = vpop.f32.mrb[0].mxu0
  %v616 = vadd.f32 0.0, %v615
  %v617 = vpop.f32.mrb[0].mxu0
  %618 = vdwg.mxu0
  %619 = vmatprep.subr.bf16.mxu0 0
  %620 = vmatpush1.bf16.msra.mxu0 %v466
  %621 = vmatprep.subr.bf16.mxu0 0
  %622 = vmatpush1.bf16.msra.mxu0 %v467
  %623 = vmatprep.subr.bf16.mxu0 0
  %624 = vmatpush1.bf16.msra.mxu0 %v468
  %625 = vmatprep.subr.bf16.mxu0 0
  %626 = vmatpush1.bf16.msra.mxu0 %v469
  %627 = vmatprep.subr.bf16.mxu0 0
  %628 = vmatpush1.bf16.msra.mxu0 %v470
  %629 = vmatprep.subr.bf16.mxu0 0
  %630 = vmatpush1.bf16.msra.mxu0 %v471
  %631 = vmatprep.subr.bf16.mxu0 0
  %632 = vmatpush1.bf16.msra.mxu0 %v472
  %633 = vmatprep.subr.bf16.mxu0 0
  %634 = vmatpush1.bf16.msra.mxu0 %v473
  %635 = vmatprep.subr.bf16.mxu0 0
  %636 = vmatpush1.bf16.msra.mxu0 %v474
  %637 = vmatprep.subr.bf16.mxu0 0
  %638 = vmatpush1.bf16.msra.mxu0 %v475
  %639 = vmatprep.subr.bf16.mxu0 0
  %640 = vmatpush1.bf16.msra.mxu0 %v476
  %641 = vmatprep.subr.bf16.mxu0 0
  %642 = vmatpush1.bf16.msra.mxu0 %v477
  %643 = vmatprep.subr.bf16.mxu0 0
  %644 = vmatpush1.bf16.msra.mxu0 %v478
  %645 = vmatprep.subr.bf16.mxu0 0
  %646 = vmatpush1.bf16.msra.mxu0 %v479
  %647 = vmatprep.subr.bf16.mxu0 0
  %648 = vmatpush1.bf16.msra.mxu0 %v480
  %649 = vmatprep.subr.bf16.mxu0 0
  %650 = vmatpush1.bf16.msra.mxu0 %v481
  %651 = vmatprep.mubr.bf16.mxu0 %v181
  %652 = vmatmul.mubr.bf16.gmra.mrb[0].mxu0 %v180
  %v653 = vpop.f32.mrb[0].mxu0
  %v654 = vadd.f32 %v613, %v653
  %v655 = vpop.f32.mrb[0].mxu0
  %v656 = vpop.f32.mrb[0].mxu0
  %v657 = vadd.f32 %v616, %v656
  %v658 = vpop.f32.mrb[0].mxu0
  %659 = vdwg.mxu0
  %660 = vmatprep.subr.bf16.mxu0 0
  %661 = vmatpush1.bf16.msra.mxu0 %v482
  %662 = vmatprep.subr.bf16.mxu0 0
  %663 = vmatpush1.bf16.msra.mxu0 %v483
  %664 = vmatprep.subr.bf16.mxu0 0
  %665 = vmatpush1.bf16.msra.mxu0 %v484
  %666 = vmatprep.subr.bf16.mxu0 0
  %667 = vmatpush1.bf16.msra.mxu0 %v485
  %668 = vmatprep.subr.bf16.mxu0 0
  %669 = vmatpush1.bf16.msra.mxu0 %v486
  %670 = vmatprep.subr.bf16.mxu0 0
  %671 = vmatpush1.bf16.msra.mxu0 %v487
  %672 = vmatprep.subr.bf16.mxu0 0
  %673 = vmatpush1.bf16.msra.mxu0 %v488
  %674 = vmatprep.subr.bf16.mxu0 0
  %675 = vmatpush1.bf16.msra.mxu0 %v489
  %676 = vmatprep.subr.bf16.mxu0 0
  %677 = vmatpush1.bf16.msra.mxu0 %v490
  %678 = vmatprep.subr.bf16.mxu0 0
  %679 = vmatpush1.bf16.msra.mxu0 %v491
  %680 = vmatprep.subr.bf16.mxu0 0
  %681 = vmatpush1.bf16.msra.mxu0 %v492
  %682 = vmatprep.subr.bf16.mxu0 0
  %683 = vmatpush1.bf16.msra.mxu0 %v493
  %684 = vmatprep.subr.bf16.mxu0 0
  %685 = vmatpush1.bf16.msra.mxu0 %v494
  %686 = vmatprep.subr.bf16.mxu0 0
  %687 = vmatpush1.bf16.msra.mxu0 %v495
  %688 = vmatprep.subr.bf16.mxu0 0
  %689 = vmatpush1.bf16.msra.mxu0 %v496
  %690 = vmatprep.subr.bf16.mxu0 0
  %691 = vmatpush1.bf16.msra.mxu0 %v497
  %692 = vmatprep.mubr.bf16.mxu0 %v183
  %693 = vmatmul.mubr.bf16.gmra.mrb[0].mxu0 %v182
  %v694 = vpop.f32.mrb[0].mxu0
  %v695 = vadd.f32 %v654, %v694
  %v696 = vpop.f32.mrb[0].mxu0
  %v697 = vpop.f32.mrb[0].mxu0
  %v698 = vadd.f32 %v657, %v697
  %v699 = vpop.f32.mrb[0].mxu0
  %700 = vdwg.mxu0
  %701 = vmatprep.subr.bf16.mxu0 0
  %702 = vmatpush1.bf16.msra.mxu0 %v498
  %703 = vmatprep.subr.bf16.mxu0 0
  %704 = vmatpush1.bf16.msra.mxu0 %v499
  %705 = vmatprep.subr.bf16.mxu0 0
  %706 = vmatpush1.bf16.msra.mxu0 %v500
  %707 = vmatprep.subr.bf16.mxu0 0
  %708 = vmatpush1.bf16.msra.mxu0 %v501
  %709 = vmatprep.subr.bf16.mxu0 0
  %710 = vmatpush1.bf16.msra.mxu0 %v502
  %711 = vmatprep.subr.bf16.mxu0 0
  %712 = vmatpush1.bf16.msra.mxu0 %v503
  %713 = vmatprep.subr.bf16.mxu0 0
  %714 = vmatpush1.bf16.msra.mxu0 %v504
  %715 = vmatprep.subr.bf16.mxu0 0
  %716 = vmatpush1.bf16.msra.mxu0 %v505
  %717 = vmatprep.subr.bf16.mxu0 0
  %718 = vmatpush1.bf16.msra.mxu0 %v506
  %719 = vmatprep.subr.bf16.mxu0 0
  %720 = vmatpush1.bf16.msra.mxu0 %v507
  %721 = vmatprep.subr.bf16.mxu0 0
  %722 = vmatpush1.bf16.msra.mxu0 %v508
  %723 = vmatprep.subr.bf16.mxu0 0
  %724 = vmatpush1.bf16.msra.mxu0 %v509
  %725 = vmatprep.subr.bf16.mxu0 0
  %726 = vmatpush1.bf16.msra.mxu0 %v510
  %727 = vmatprep.subr.bf16.mxu0 0
  %728 = vmatpush1.bf16.msra.mxu0 %v511
  %729 = vmatprep.subr.bf16.mxu0 0
  %730 = vmatpush1.bf16.msra.mxu0 %v512
  %731 = vmatprep.subr.bf16.mxu0 0
  %732 = vmatpush1.bf16.msra.mxu0 %v513
  %733 = vmatprep.mubr.bf16.mxu0 %v185
  %734 = vmatmul.mubr.bf16.gmra.mrb[0].mxu0 %v184
  %v735 = vpop.f32.mrb[0].mxu0
  %v736 = vadd.f32 %v695, %v735
  %v737 = vpop.f32.mrb[0].mxu0
  %v738 = vpop.f32.mrb[0].mxu0
  %v739 = vadd.f32 %v698, %v738
  %v740 = vpop.f32.mrb[0].mxu0
  %741 = vdwg.mxu0
  %v742 = vld [vmem:[%s2] sm:$0x1]
  %v744 = vlaneseq
  %v745 = vshrl.u32 %v744, 7
  %v746 = vsub.s32 0, %v745
  %v747 = vrot.slane %v742, %v746
  %v749 = vmul.f32 %v736, %v747
  %v750 = vmul.f32 %v739, %v747
  %v751 = vld [vmem:[%s3] sm:$0x1]
  %v753 = vlaneseq
  %v754 = vshrl.u32 %v753, 7
  %v755 = vsub.s32 0, %v754
  %v756 = vrot.slane %v751, %v755
  %v758 = vadd.f32 %v749, %v756
  %v759 = vadd.f32 %v750, %v756
  %vm760 = vcmp.ge.f32.partialorder %v758, 0.0
  %vm761 = vcmp.ge.f32.partialorder %v759, 0.0
  %v762 = vmul.f32 %v758, 0.2
  %v763 = vmul.f32 %v759, 0.2
  %v764 = vsel %vm760, %v758, %v762
  %v765 = vsel %vm761, %v759, %v763
  %v766 = vpack.c.bf16 %v765, %v764
  %v768 = vunpack.c.l.b16 %v766
  %v769 = vunpack.c.h.b16 %v766
  %v770 = vpack.c.b16 %v768, %v768
  %v771 = vpack.c.b16 %v769, %v769
  %774 = vst [vmem:[%s4] sm:$0xf] %v770
  %775 = vst [vmem:[%s4 + $0x4] sm:$0xf] %v771
  // Predicated region
  $region18: #{forward.8} parent=0 // pred_check
    _
  $region19: #{forward.8} parent=0 // pred_check_branch
    %777 = sbr.rel (0) target = $region21
  $region20: #{forward.8} parent=0 // pred_region
    _
  $region21: #{forward.8} parent=0 // pred_fallthru
    _
  // Predicated region
  $region22: #{forward.8} parent=0 // pred_check
    _
  $region23: #{forward.8} parent=0 // pred_check_branch
    %779 = sbr.rel (0) target = $region25
  $region24: #{forward.8} parent=0 // pred_region
    _
  $region25: #{forward.8} parent=0 // pred_fallthru
    _

</llo_original>
